<compile_context>
chip_gen: v6e
topology: v6e:2x2x1
jax: 0.10.0
libtpu: 0.0.40
codegen_flags: <defaults>
</compile_context>

<pallas_src>
import functools

import jax
import jax.numpy as jnp
import numpy as np
from jax import lax
from jax.experimental import pallas as pl
from jax.experimental.pallas import tpu as pltpu

EPS = 1e-12


def _inclusive_prefix_sum(x, length):
    """Inclusive prefix sum along axis 0 of a 2-D f32 array.

    Hillis-Steele scan: ceil(log2(length)) pltpu.roll (XLU sublane rotate) + masked
    adds.  O(length) work; replaces the old O(length^2) lower-triangular MXU matmul.
    """
    if length <= 1:
        return x
    idx = lax.broadcasted_iota(jnp.int32, x.shape, 0)
    shift = 1
    while shift < length:
        rolled = pltpu.roll(x, shift, axis=0)          # rolled[i] = x[(i - shift) % length]
        x = x + jnp.where(idx >= shift, rolled, 0.0)   # only take valid (i >= shift) terms
        shift *= 2
    return x


def _make_kernel(t_rows, w_out, c_in, c_fused, eps):
    del c_in, c_fused  # shapes come from the refs

    def kernel(xe_ref, xo_ref, dw_ref, dwb_ref, g_ref, b_ref, wf_ref, bf_ref,
               out_ref, carry_ref):
        h_tile = pl.program_id(1)

        # Reset the running cLN statistics at the start of each batch element.
        @pl.when(h_tile == 0)
        def _():
            carry_ref[...] = jnp.zeros_like(carry_ref)

        carry_s = carry_ref[:, 0:1]          # (1, 1) running sum over all previous positions
        carry_q = carry_ref[:, 1:2]          # (1, 1) running sum of squares

        w0 = dw_ref[0:1, :]                  # (1, C) depthwise taps
        w1 = dw_ref[1:2, :]
        w2 = dw_ref[2:3, :]
        dwb = dwb_ref[...]                   # (1, C)
        gamma = g_ref[...]                   # (1, C)
        beta = b_ref[...]                    # (1, C)
        wf = wf_ref[...]                     # (C, C_out + C_skip) bf16
        bias = bf_ref[...]                   # (1, C_out + C_skip) f32

        pos_in_row = lax.broadcasted_iota(jnp.int32, (w_out, 1), 0).astype(jnp.float32)
        n_ch = float(dw_ref.shape[1])

        for r in range(t_rows):              # static unroll; carries thread through Python vars
            xe = xe_ref[0, r]                # (W_out + 1, C) even input columns
            xo = xo_ref[0, r]                # (W_out, C)     odd  input columns

            # ---- depthwise conv, kernel (1,3), stride (1,2), groups=C ------------
            y = dwb + xe[:w_out, :] * w0 + xo * w1 + xe[1:w_out + 1, :] * w2   # (W_out, C)

            # ---- causal cumulative LayerNorm (cLN) -------------------------------
            ssum = jnp.sum(y, axis=1, keepdims=True)          # (W_out, 1)
            ssq = jnp.sum(y * y, axis=1, keepdims=True)       # (W_out, 1)
            csum = _inclusive_prefix_sum(ssum, w_out) + carry_s
            csq = _inclusive_prefix_sum(ssq, w_out) + carry_q

            row_idx = h_tile * t_rows + r                     # global H row
            base = (row_idx * w_out).astype(jnp.float32)
            cnt = (base + pos_in_row + 1.0) * n_ch            # (W_out, 1) element counts
            mean = csum / cnt
            var = jnp.maximum(csq / cnt - mean * mean, 0.0)   # clamp f32 cancellation
            y_norm = (y - mean) / (jnp.sqrt(var) + eps) * gamma + beta

            # ---- fused pointwise (1x1) convolutions (bf16 MXU, f32 accumulate) ---
            out_ref[0, r] = jnp.dot(y_norm.astype(jnp.bfloat16), wf,
                                    preferred_element_type=jnp.float32) + bias

            carry_s = csum[w_out - 1:w_out, :]
            carry_q = csq[w_out - 1:w_out, :]

        carry_ref[:, 0:1] = carry_s
        carry_ref[:, 1:2] = carry_q

    return kernel


def depthwise_separable_conv2d(x, params, *, eps=EPS, rows_per_step=None):
    """Forward pass of DepthwiseSeparableConv2d. x is NCHW; returns (output, skip) NCHW."""
    dw_w, dw_b, gamma, beta, w_out, b_out, w_skip, b_skip = params
    N, C, H, W = x.shape
    KW, SW = 3, 2
    W_out = (W - KW) // SW + 1
    C_out = w_out.shape[0]
    C_skip = w_skip.shape[0]
    Cc = C_out + C_skip

    if rows_per_step is None:
        rows_per_step = min(H, 8)
    rows_per_step = max(1, min(rows_per_step, H))
    while H % rows_per_step != 0:
        rows_per_step -= 1
    tR = rows_per_step

    # Glue: channel-last layout, split even/odd W columns (same total bytes as x, no
    # 3x tap duplication).  Slice to exactly the columns the kernel needs.
    x_cl = jnp.transpose(x, (0, 2, 3, 1))                    # (N, H, W, C)
    x_even = x_cl[:, :, 0::2, :][:, :, :W_out + 1, :]        # (N, H, W_out+1, C)
    x_odd = x_cl[:, :, 1::2, :][:, :, :W_out, :]             # (N, H, W_out,   C)

    dw_w_t = jnp.transpose(dw_w[:, 0, 0, :], (1, 0))         # (3, C)
    w_fused = jnp.concatenate([w_out[:, :, 0, 0], w_skip[:, :, 0, 0]], axis=0)   # (Cc, C)
    w_fused_t = jnp.transpose(w_fused, (1, 0)).astype(jnp.bfloat16)              # (C, Cc)
    b_fused = jnp.concatenate([b_out, b_skip]).reshape(1, Cc)

    kernel = _make_kernel(tR, W_out, C, Cc, eps)
    fused = pl.pallas_call(
        kernel,
        out_shape=jax.ShapeDtypeStruct((N, H, W_out, Cc), jnp.float32),
        grid=(N, H // tR),
        in_specs=[
            pl.BlockSpec((1, tR, W_out + 1, C), lambda n, h: (n, h, 0, 0)),
            pl.BlockSpec((1, tR, W_out, C), lambda n, h: (n, h, 0, 0)),
            pl.BlockSpec((3, C), lambda n, h: (0, 0)),
            pl.BlockSpec((1, C), lambda n, h: (0, 0)),
            pl.BlockSpec((1, C), lambda n, h: (0, 0)),
            pl.BlockSpec((1, C), lambda n, h: (0, 0)),
            pl.BlockSpec((C, Cc), lambda n, h: (0, 0)),
            pl.BlockSpec((1, Cc), lambda n, h: (0, 0)),
        ],
        out_specs=pl.BlockSpec((1, tR, W_out, Cc), lambda n, h: (n, h, 0, 0)),
        scratch_shapes=[pltpu.VMEM((1, 2), jnp.float32)],     # (cum_sum, cum_sumsq) carry
        compiler_params=pltpu.CompilerParams(
            dimension_semantics=("parallel", "arbitrary")),
    )(x_even, x_odd, dw_w_t, dw_b.reshape(1, C), gamma.reshape(1, C),
      beta.reshape(1, C), w_fused_t, b_fused)

    # Single boundary transpose back to the module's NCHW convention, then split the
    # fused channel slab.  (A channel-last network would skip this entirely.)
    fused_nchw = jnp.transpose(fused, (0, 3, 1, 2))          # (N, Cc, H, W_out)
    out = fused_nchw[:, :C_out]
    skip = fused_nchw[:, C_out:]
    return out, skip


def reference_forward(x, params, *, eps=EPS):
    """Pure-JAX reference mirroring the PyTorch forward (for verification).

    The 1x1-conv operands are cast to bf16 (f32 accumulation) to match the kernel's
    MXU input precision; everything else is exact f32.
    """
    dw_w, dw_b, gamma, beta, w_out, b_out, w_skip, b_skip = params
    N, C, H, W = x.shape
    KW, SW = 3, 2
    W_out = (W - KW) // SW + 1
    y = dw_b[None, :, None, None]
    for k in range(KW):
        y = y + x[:, :, :, k:k + SW * (W_out - 1) + 1:SW] * dw_w[:, 0, 0, k][None, :, None, None]
    T = H * W_out
    yr = y.reshape(N, C, T)
    step_sum = yr.sum(axis=1)
    step_sq = (yr ** 2).sum(axis=1)
    cum_sum = jnp.cumsum(step_sum, axis=1)
    cum_sq = jnp.cumsum(step_sq, axis=1)
    cum_num = jnp.arange(1, T + 1, dtype=jnp.float32) * C
    cum_mean = cum_sum / cum_num
    cum_var = jnp.maximum(cum_sq / cum_num - cum_mean ** 2, 0.0)
    yn = (yr - cum_mean[:, None, :]) / (jnp.sqrt(cum_var[:, None, :]) + eps)
    yn = (yn * gamma.reshape(1, C, 1) + beta.reshape(1, C, 1)).reshape(N, C, H, W_out)
    yn_bf = yn.astype(jnp.bfloat16)
    out = jnp.einsum('oc,nchw->nohw', w_out[:, :, 0, 0].astype(jnp.bfloat16), yn_bf,
                     preferred_element_type=jnp.float32) + b_out[None, :, None, None]
    skip = jnp.einsum('oc,nchw->nohw', w_skip[:, :, 0, 0].astype(jnp.bfloat16), yn_bf,
                      preferred_element_type=jnp.float32) + b_skip[None, :, None, None]
    return out, skip


if __name__ == "__main__":
    N, C, H, W = 2, 8, 8, 16          # x: NCHW
    C_out, C_skip = 16, 16
    key = jax.random.PRNGKey(0)
    ks = jax.random.split(key, 9)
    x = jax.random.normal(ks[0], (N, C, H, W), jnp.float32)
    # Parameter shapes follow the PyTorch module's __init__:
    dw_w = 0.3 * jax.random.normal(ks[1], (C, 1, 1, 3), jnp.float32)   # depthwise Conv2d weight
    dw_b = 0.1 * jax.random.normal(ks[2], (C,), jnp.float32)           # depthwise Conv2d bias
    gamma = 1.0 + 0.1 * jax.random.normal(ks[3], (C,), jnp.float32)    # cLN gamma (1,C,1)
    beta = 0.1 * jax.random.normal(ks[4], (C,), jnp.float32)           # cLN beta  (1,C,1)
    w_out = 0.3 * jax.random.normal(ks[5], (C_out, C, 1, 1), jnp.float32)
    b_out = 0.1 * jax.random.normal(ks[6], (C_out,), jnp.float32)
    w_skip = 0.3 * jax.random.normal(ks[7], (C_skip, C, 1, 1), jnp.float32)
    b_skip = 0.1 * jax.random.normal(ks[8], (C_skip,), jnp.float32)
    params = (dw_w, dw_b, gamma, beta, w_out, b_out, w_skip, b_skip)

    # rows_per_step=4 -> two H-tiles per batch element, exercising the cross-tile
    # cumulative-LayerNorm carry path.
    fwd = jax.jit(functools.partial(depthwise_separable_conv2d, rows_per_step=4))
    out, skip = fwd(x, params)
    jax.block_until_ready((out, skip))

    W_out_sz = (W - 3) // 2 + 1
    assert out.shape == (N, C_out, H, W_out_sz)
    assert skip.shape == (N, C_skip, H, W_out_sz)

    ref_out, ref_skip = reference_forward(x, params)
    # Tolerance covers bf16 MXU inputs for the 1x1 convs (f32 accumulation).
    np.testing.assert_allclose(np.asarray(out), np.asarray(ref_out), atol=5e-3, rtol=5e-3)
    np.testing.assert_allclose(np.asarray(skip), np.asarray(ref_skip), atol=5e-3, rtol=5e-3)

    print("KERNEL_OK")
</pallas_src>

<mosaic_0001>
module attributes {stable_mosaic.version = 11 : i64} {
  func.func @kernel(%arg0: i32, %arg1: i32, %arg2: memref<1x4x8x8xf32, #tpu.memory_space<vmem>>, %arg3: memref<1x4x7x8xf32, #tpu.memory_space<vmem>>, %arg4: memref<3x8xf32, #tpu.memory_space<vmem>>, %arg5: memref<1x8xf32, #tpu.memory_space<vmem>>, %arg6: memref<1x8xf32, #tpu.memory_space<vmem>>, %arg7: memref<1x8xf32, #tpu.memory_space<vmem>>, %arg8: memref<8x32xbf16, #tpu.memory_space<vmem>>, %arg9: memref<1x32xf32, #tpu.memory_space<vmem>>, %arg10: memref<1x4x7x32xf32, #tpu.memory_space<vmem>>, %arg11: memref<1x2xf32, #tpu.memory_space<vmem>>) attributes {dimension_semantics = [#tpu.dimension_semantics<parallel>, #tpu.dimension_semantics<arbitrary>], iteration_bounds = array<i64: 2, 2>, scalar_prefetch = 0 : i64, scratch_operands = 1 : i64, tpu.core_type = #tpu.core_type<tc>, window_params = [{transform_indices = @transform_0, window_bounds = array<i64: 1, 4, 8, 8>}, {transform_indices = @transform_1, window_bounds = array<i64: 1, 4, 7, 8>}, {pipeline_mode = #tpu.pipeline_mode<synchronous>, transform_indices = @transform_2, window_bounds = array<i64: 3, 8>}, {pipeline_mode = #tpu.pipeline_mode<synchronous>, transform_indices = @transform_3, window_bounds = array<i64: 1, 8>}, {pipeline_mode = #tpu.pipeline_mode<synchronous>, transform_indices = @transform_4, window_bounds = array<i64: 1, 8>}, {pipeline_mode = #tpu.pipeline_mode<synchronous>, transform_indices = @transform_5, window_bounds = array<i64: 1, 8>}, {pipeline_mode = #tpu.pipeline_mode<synchronous>, transform_indices = @transform_6, window_bounds = array<i64: 8, 32>}, {pipeline_mode = #tpu.pipeline_mode<synchronous>, transform_indices = @transform_7, window_bounds = array<i64: 1, 32>}, {transform_indices = @transform_8, window_bounds = array<i64: 1, 4, 7, 32>}]} {
    %c0_i32 = arith.constant 0 : i32
    %0 = arith.cmpi eq, %arg1, %c0_i32 : i32
    %1 = arith.extui %0 : i1 to i32
    %c0_i32_0 = arith.constant 0 : i32
    %2 = arith.cmpi ne, %1, %c0_i32_0 : i32
    scf.if %2 {
      %cst_175 = arith.constant 0.000000e+00 : f32
      %413 = vector.broadcast %cst_175 : f32 to vector<1x2xf32>
      %c0_176 = arith.constant 0 : index
      %c0_177 = arith.constant 0 : index
      %414 = vector.load %arg11[%c0_176, %c0_177] : memref<1x2xf32, #tpu.memory_space<vmem>>, vector<1x2xf32>
      tpu.vector_store %arg11[%c0_176, %c0_177], %413 {strides = array<i32>} : memref<1x2xf32, #tpu.memory_space<vmem>>, vector<1x2xf32>,
    } else {
    }
    %c0 = arith.constant 0 : index
    %c0_1 = arith.constant 0 : index
    %3 = vector.load %arg11[%c0, %c0_1] : memref<1x2xf32, #tpu.memory_space<vmem>>, vector<1x1xf32>
    %c0_2 = arith.constant 0 : index
    %c1 = arith.constant 1 : index
    %4 = vector.load %arg11[%c0_2, %c1] : memref<1x2xf32, #tpu.memory_space<vmem>>, vector<1x1xf32>
    %c0_3 = arith.constant 0 : index
    %c0_4 = arith.constant 0 : index
    %5 = vector.load %arg4[%c0_3, %c0_4] : memref<3x8xf32, #tpu.memory_space<vmem>>, vector<1x8xf32>
    %c1_5 = arith.constant 1 : index
    %c0_6 = arith.constant 0 : index
    %6 = vector.load %arg4[%c1_5, %c0_6] : memref<3x8xf32, #tpu.memory_space<vmem>>, vector<1x8xf32>
    %c2 = arith.constant 2 : index
    %c0_7 = arith.constant 0 : index
    %7 = vector.load %arg4[%c2, %c0_7] : memref<3x8xf32, #tpu.memory_space<vmem>>, vector<1x8xf32>
    %c0_8 = arith.constant 0 : index
    %c0_9 = arith.constant 0 : index
    %8 = vector.load %arg5[%c0_8, %c0_9] : memref<1x8xf32, #tpu.memory_space<vmem>>, vector<1x8xf32>
    %c0_10 = arith.constant 0 : index
    %c0_11 = arith.constant 0 : index
    %9 = vector.load %arg6[%c0_10, %c0_11] : memref<1x8xf32, #tpu.memory_space<vmem>>, vector<1x8xf32>
    %c0_12 = arith.constant 0 : index
    %c0_13 = arith.constant 0 : index
    %10 = vector.load %arg7[%c0_12, %c0_13] : memref<1x8xf32, #tpu.memory_space<vmem>>, vector<1x8xf32>
    %c0_14 = arith.constant 0 : index
    %c0_15 = arith.constant 0 : index
    %11 = vector.load %arg8[%c0_14, %c0_15] : memref<8x32xbf16, #tpu.memory_space<vmem>>, vector<8x32xbf16>
    %c0_16 = arith.constant 0 : index
    %c0_17 = arith.constant 0 : index
    %12 = vector.load %arg9[%c0_16, %c0_17] : memref<1x32xf32, #tpu.memory_space<vmem>>, vector<1x32xf32>
    %13 = tpu.iota {dimensions = array<i32: 0>} : vector<7x1xi32>
    %14 = arith.sitofp %13 : vector<7x1xi32> to vector<7x1xf32>
    %c0_18 = arith.constant 0 : index
    %c0_19 = arith.constant 0 : index
    %c0_20 = arith.constant 0 : index
    %c0_21 = arith.constant 0 : index
    %15 = vector.load %arg2[%c0_18, %c0_19, %c0_20, %c0_21] : memref<1x4x8x8xf32, #tpu.memory_space<vmem>>, vector<1x1x8x8xf32>
    %16 = vector.shape_cast %15 : vector<1x1x8x8xf32> to vector<8x8xf32>
    %c0_22 = arith.constant 0 : index
    %c0_23 = arith.constant 0 : index
    %c0_24 = arith.constant 0 : index
    %c0_25 = arith.constant 0 : index
    %17 = vector.load %arg3[%c0_22, %c0_23, %c0_24, %c0_25] : memref<1x4x7x8xf32, #tpu.memory_space<vmem>>, vector<1x1x7x8xf32>
    %18 = vector.shape_cast %17 : vector<1x1x7x8xf32> to vector<7x8xf32>
    %19 = vector.extract_strided_slice %16 {offsets = [0, 0], sizes = [7, 8], strides = [1, 1]} : vector<8x8xf32> to vector<7x8xf32>
    %20 = vector.broadcast %5 : vector<1x8xf32> to vector<7x8xf32>
    %21 = arith.mulf %19, %20 : vector<7x8xf32>
    %22 = vector.broadcast %8 : vector<1x8xf32> to vector<7x8xf32>
    %23 = arith.addf %22, %21 : vector<7x8xf32>
    %24 = vector.broadcast %6 : vector<1x8xf32> to vector<7x8xf32>
    %25 = arith.mulf %18, %24 : vector<7x8xf32>
    %26 = arith.addf %23, %25 : vector<7x8xf32>
    %27 = vector.extract_strided_slice %16 {offsets = [1, 0], sizes = [7, 8], strides = [1, 1]} : vector<8x8xf32> to vector<7x8xf32>
    %28 = vector.broadcast %7 : vector<1x8xf32> to vector<7x8xf32>
    %29 = arith.mulf %27, %28 : vector<7x8xf32>
    %30 = arith.addf %26, %29 : vector<7x8xf32>
    %cst = arith.constant dense<0.000000e+00> : vector<7xf32>
    %31 = vector.multi_reduction <add>, %30, %cst [1] : vector<7x8xf32> to vector<7xf32>
    %32 = vector.shape_cast %31 : vector<7xf32> to vector<7x1xf32>
    %33 = arith.mulf %30, %30 : vector<7x8xf32>
    %cst_26 = arith.constant dense<0.000000e+00> : vector<7xf32>
    %34 = vector.multi_reduction <add>, %33, %cst_26 [1] : vector<7x8xf32> to vector<7xf32>
    %35 = vector.shape_cast %34 : vector<7xf32> to vector<7x1xf32>
    %36 = tpu.iota {dimensions = array<i32: 0>} : vector<7x1xi32>
    %c1_i32 = arith.constant 1 : i32
    %37 = tpu.dynamic_rotate %32 by %c1_i32 dim 0 : vector<7x1xf32>, i32 -> vector<7x1xf32>
    %c1_i32_27 = arith.constant 1 : i32
    %38 = vector.broadcast %c1_i32_27 : i32 to vector<7x1xi32>
    %39 = arith.cmpi sge, %36, %38 : vector<7x1xi32>
    %cst_28 = arith.constant 0.000000e+00 : f32
    %40 = vector.broadcast %cst_28 : f32 to vector<7x1xf32>
    %41 = arith.select %39, %37, %40 : vector<7x1xi1>, vector<7x1xf32>
    %42 = arith.addf %32, %41 : vector<7x1xf32>
    %c2_i32 = arith.constant 2 : i32
    %43 = tpu.dynamic_rotate %42 by %c2_i32 dim 0 : vector<7x1xf32>, i32 -> vector<7x1xf32>
    %c2_i32_29 = arith.constant 2 : i32
    %44 = vector.broadcast %c2_i32_29 : i32 to vector<7x1xi32>
    %45 = arith.cmpi sge, %36, %44 : vector<7x1xi32>
    %cst_30 = arith.constant 0.000000e+00 : f32
    %46 = vector.broadcast %cst_30 : f32 to vector<7x1xf32>
    %47 = arith.select %45, %43, %46 : vector<7x1xi1>, vector<7x1xf32>
    %48 = arith.addf %42, %47 : vector<7x1xf32>
    %c4_i32 = arith.constant 4 : i32
    %49 = tpu.dynamic_rotate %48 by %c4_i32 dim 0 : vector<7x1xf32>, i32 -> vector<7x1xf32>
    %c4_i32_31 = arith.constant 4 : i32
    %50 = vector.broadcast %c4_i32_31 : i32 to vector<7x1xi32>
    %51 = arith.cmpi sge, %36, %50 : vector<7x1xi32>
    %cst_32 = arith.constant 0.000000e+00 : f32
    %52 = vector.broadcast %cst_32 : f32 to vector<7x1xf32>
    %53 = arith.select %51, %49, %52 : vector<7x1xi1>, vector<7x1xf32>
    %54 = arith.addf %48, %53 : vector<7x1xf32>
    %55 = vector.broadcast %3 : vector<1x1xf32> to vector<7x1xf32>
    %56 = arith.addf %54, %55 : vector<7x1xf32>
    %57 = tpu.iota {dimensions = array<i32: 0>} : vector<7x1xi32>
    %c1_i32_33 = arith.constant 1 : i32
    %58 = tpu.dynamic_rotate %35 by %c1_i32_33 dim 0 : vector<7x1xf32>, i32 -> vector<7x1xf32>
    %c1_i32_34 = arith.constant 1 : i32
    %59 = vector.broadcast %c1_i32_34 : i32 to vector<7x1xi32>
    %60 = arith.cmpi sge, %57, %59 : vector<7x1xi32>
    %cst_35 = arith.constant 0.000000e+00 : f32
    %61 = vector.broadcast %cst_35 : f32 to vector<7x1xf32>
    %62 = arith.select %60, %58, %61 : vector<7x1xi1>, vector<7x1xf32>
    %63 = arith.addf %35, %62 : vector<7x1xf32>
    %c2_i32_36 = arith.constant 2 : i32
    %64 = tpu.dynamic_rotate %63 by %c2_i32_36 dim 0 : vector<7x1xf32>, i32 -> vector<7x1xf32>
    %c2_i32_37 = arith.constant 2 : i32
    %65 = vector.broadcast %c2_i32_37 : i32 to vector<7x1xi32>
    %66 = arith.cmpi sge, %57, %65 : vector<7x1xi32>
    %cst_38 = arith.constant 0.000000e+00 : f32
    %67 = vector.broadcast %cst_38 : f32 to vector<7x1xf32>
    %68 = arith.select %66, %64, %67 : vector<7x1xi1>, vector<7x1xf32>
    %69 = arith.addf %63, %68 : vector<7x1xf32>
    %c4_i32_39 = arith.constant 4 : i32
    %70 = tpu.dynamic_rotate %69 by %c4_i32_39 dim 0 : vector<7x1xf32>, i32 -> vector<7x1xf32>
    %c4_i32_40 = arith.constant 4 : i32
    %71 = vector.broadcast %c4_i32_40 : i32 to vector<7x1xi32>
    %72 = arith.cmpi sge, %57, %71 : vector<7x1xi32>
    %cst_41 = arith.constant 0.000000e+00 : f32
    %73 = vector.broadcast %cst_41 : f32 to vector<7x1xf32>
    %74 = arith.select %72, %70, %73 : vector<7x1xi1>, vector<7x1xf32>
    %75 = arith.addf %69, %74 : vector<7x1xf32>
    %76 = vector.broadcast %4 : vector<1x1xf32> to vector<7x1xf32>
    %77 = arith.addf %75, %76 : vector<7x1xf32>
    %c4_i32_42 = arith.constant 4 : i32
    %78 = arith.muli %arg1, %c4_i32_42 : i32
    %c0_i32_43 = arith.constant 0 : i32
    %79 = arith.addi %78, %c0_i32_43 : i32
    %c7_i32 = arith.constant 7 : i32
    %80 = arith.muli %79, %c7_i32 : i32
    %81 = arith.sitofp %80 : i32 to f32
    %82 = vector.broadcast %81 : f32 to vector<7x1xf32>
    %83 = arith.addf %82, %14 : vector<7x1xf32>
    %cst_44 = arith.constant 1.000000e+00 : f32
    %84 = vector.broadcast %cst_44 : f32 to vector<7x1xf32>
    %85 = arith.addf %83, %84 : vector<7x1xf32>
    %cst_45 = arith.constant 8.000000e+00 : f32
    %86 = vector.broadcast %cst_45 : f32 to vector<7x1xf32>
    %87 = arith.mulf %85, %86 : vector<7x1xf32>
    %88 = arith.divf %56, %87 : vector<7x1xf32>
    %89 = arith.divf %77, %87 : vector<7x1xf32>
    %90 = arith.mulf %88, %88 : vector<7x1xf32>
    %91 = arith.subf %89, %90 : vector<7x1xf32>
    %cst_46 = arith.constant 0.000000e+00 : f32
    %92 = vector.broadcast %cst_46 : f32 to vector<7x1xf32>
    %93 = arith.maximumf %91, %92 : vector<7x1xf32>
    %94 = vector.broadcast %88 : vector<7x1xf32> to vector<7x8xf32>
    %95 = arith.subf %30, %94 : vector<7x8xf32>
    %96 = math.sqrt %93 : vector<7x1xf32>
    %cst_47 = arith.constant 9.99999996E-13 : f32
    %97 = vector.broadcast %cst_47 : f32 to vector<7x1xf32>
    %98 = arith.addf %96, %97 : vector<7x1xf32>
    %99 = vector.broadcast %98 : vector<7x1xf32> to vector<7x8xf32>
    %100 = arith.divf %95, %99 : vector<7x8xf32>
    %101 = vector.broadcast %9 : vector<1x8xf32> to vector<7x8xf32>
    %102 = arith.mulf %100, %101 : vector<7x8xf32>
    %103 = vector.broadcast %10 : vector<1x8xf32> to vector<7x8xf32>
    %104 = arith.addf %102, %103 : vector<7x8xf32>
    %105 = arith.truncf %104 : vector<7x8xf32> to vector<7x8xbf16>
    %cst_48 = arith.constant dense<0.000000e+00> : vector<7x32xf32>
    %106 = tpu.matmul %105, %11, %cst_48 {dimension_numbers = #tpu.dot_dimension_numbers<[1], [0], [0], [1], [0, 0, 1, 1], [], []>} : vector<7x8xbf16>, vector<8x32xbf16>, vector<7x32xf32> -> vector<7x32xf32>
    %107 = vector.broadcast %12 : vector<1x32xf32> to vector<7x32xf32>
    %108 = arith.addf %106, %107 : vector<7x32xf32>
    %c0_49 = arith.constant 0 : index
    %c0_50 = arith.constant 0 : index
    %c0_51 = arith.constant 0 : index
    %c0_52 = arith.constant 0 : index
    %109 = vector.load %arg10[%c0_49, %c0_50, %c0_51, %c0_52] : memref<1x4x7x32xf32, #tpu.memory_space<vmem>>, vector<1x1x7x32xf32>
    %110 = vector.shape_cast %109 : vector<1x1x7x32xf32> to vector<7x32xf32>
    %111 = vector.shape_cast %108 : vector<7x32xf32> to vector<1x1x7x32xf32>
    tpu.vector_store %arg10[%c0_49, %c0_50, %c0_51, %c0_52], %111 {strides = array<i32>} : memref<1x4x7x32xf32, #tpu.memory_space<vmem>>, vector<1x1x7x32xf32>,
    %112 = vector.extract_strided_slice %56 {offsets = [6, 0], sizes = [1, 1], strides = [1, 1]} : vector<7x1xf32> to vector<1x1xf32>
    %113 = vector.extract_strided_slice %77 {offsets = [6, 0], sizes = [1, 1], strides = [1, 1]} : vector<7x1xf32> to vector<1x1xf32>
    %c0_53 = arith.constant 0 : index
    %c1_54 = arith.constant 1 : index
    %c0_55 = arith.constant 0 : index
    %c0_56 = arith.constant 0 : index
    %114 = vector.load %arg2[%c0_53, %c1_54, %c0_55, %c0_56] : memref<1x4x8x8xf32, #tpu.memory_space<vmem>>, vector<1x1x8x8xf32>
    %115 = vector.shape_cast %114 : vector<1x1x8x8xf32> to vector<8x8xf32>
    %c0_57 = arith.constant 0 : index
    %c1_58 = arith.constant 1 : index
    %c0_59 = arith.constant 0 : index
    %c0_60 = arith.constant 0 : index
    %116 = vector.load %arg3[%c0_57, %c1_58, %c0_59, %c0_60] : memref<1x4x7x8xf32, #tpu.memory_space<vmem>>, vector<1x1x7x8xf32>
    %117 = vector.shape_cast %116 : vector<1x1x7x8xf32> to vector<7x8xf32>
    %118 = vector.extract_strided_slice %115 {offsets = [0, 0], sizes = [7, 8], strides = [1, 1]} : vector<8x8xf32> to vector<7x8xf32>
    %119 = vector.broadcast %5 : vector<1x8xf32> to vector<7x8xf32>
    %120 = arith.mulf %118, %119 : vector<7x8xf32>
    %121 = vector.broadcast %8 : vector<1x8xf32> to vector<7x8xf32>
    %122 = arith.addf %121, %120 : vector<7x8xf32>
    %123 = vector.broadcast %6 : vector<1x8xf32> to vector<7x8xf32>
    %124 = arith.mulf %117, %123 : vector<7x8xf32>
    %125 = arith.addf %122, %124 : vector<7x8xf32>
    %126 = vector.extract_strided_slice %115 {offsets = [1, 0], sizes = [7, 8], strides = [1, 1]} : vector<8x8xf32> to vector<7x8xf32>
    %127 = vector.broadcast %7 : vector<1x8xf32> to vector<7x8xf32>
    %128 = arith.mulf %126, %127 : vector<7x8xf32>
    %129 = arith.addf %125, %128 : vector<7x8xf32>
    %cst_61 = arith.constant dense<0.000000e+00> : vector<7xf32>
    %130 = vector.multi_reduction <add>, %129, %cst_61 [1] : vector<7x8xf32> to vector<7xf32>
    %131 = vector.shape_cast %130 : vector<7xf32> to vector<7x1xf32>
    %132 = arith.mulf %129, %129 : vector<7x8xf32>
    %cst_62 = arith.constant dense<0.000000e+00> : vector<7xf32>
    %133 = vector.multi_reduction <add>, %132, %cst_62 [1] : vector<7x8xf32> to vector<7xf32>
    %134 = vector.shape_cast %133 : vector<7xf32> to vector<7x1xf32>
    %135 = tpu.iota {dimensions = array<i32: 0>} : vector<7x1xi32>
    %c1_i32_63 = arith.constant 1 : i32
    %136 = tpu.dynamic_rotate %131 by %c1_i32_63 dim 0 : vector<7x1xf32>, i32 -> vector<7x1xf32>
    %c1_i32_64 = arith.constant 1 : i32
    %137 = vector.broadcast %c1_i32_64 : i32 to vector<7x1xi32>
    %138 = arith.cmpi sge, %135, %137 : vector<7x1xi32>
    %cst_65 = arith.constant 0.000000e+00 : f32
    %139 = vector.broadcast %cst_65 : f32 to vector<7x1xf32>
    %140 = arith.select %138, %136, %139 : vector<7x1xi1>, vector<7x1xf32>
    %141 = arith.addf %131, %140 : vector<7x1xf32>
    %c2_i32_66 = arith.constant 2 : i32
    %142 = tpu.dynamic_rotate %141 by %c2_i32_66 dim 0 : vector<7x1xf32>, i32 -> vector<7x1xf32>
    %c2_i32_67 = arith.constant 2 : i32
    %143 = vector.broadcast %c2_i32_67 : i32 to vector<7x1xi32>
    %144 = arith.cmpi sge, %135, %143 : vector<7x1xi32>
    %cst_68 = arith.constant 0.000000e+00 : f32
    %145 = vector.broadcast %cst_68 : f32 to vector<7x1xf32>
    %146 = arith.select %144, %142, %145 : vector<7x1xi1>, vector<7x1xf32>
    %147 = arith.addf %141, %146 : vector<7x1xf32>
    %c4_i32_69 = arith.constant 4 : i32
    %148 = tpu.dynamic_rotate %147 by %c4_i32_69 dim 0 : vector<7x1xf32>, i32 -> vector<7x1xf32>
    %c4_i32_70 = arith.constant 4 : i32
    %149 = vector.broadcast %c4_i32_70 : i32 to vector<7x1xi32>
    %150 = arith.cmpi sge, %135, %149 : vector<7x1xi32>
    %cst_71 = arith.constant 0.000000e+00 : f32
    %151 = vector.broadcast %cst_71 : f32 to vector<7x1xf32>
    %152 = arith.select %150, %148, %151 : vector<7x1xi1>, vector<7x1xf32>
    %153 = arith.addf %147, %152 : vector<7x1xf32>
    %154 = vector.broadcast %112 : vector<1x1xf32> to vector<7x1xf32>
    %155 = arith.addf %153, %154 : vector<7x1xf32>
    %156 = tpu.iota {dimensions = array<i32: 0>} : vector<7x1xi32>
    %c1_i32_72 = arith.constant 1 : i32
    %157 = tpu.dynamic_rotate %134 by %c1_i32_72 dim 0 : vector<7x1xf32>, i32 -> vector<7x1xf32>
    %c1_i32_73 = arith.constant 1 : i32
    %158 = vector.broadcast %c1_i32_73 : i32 to vector<7x1xi32>
    %159 = arith.cmpi sge, %156, %158 : vector<7x1xi32>
    %cst_74 = arith.constant 0.000000e+00 : f32
    %160 = vector.broadcast %cst_74 : f32 to vector<7x1xf32>
    %161 = arith.select %159, %157, %160 : vector<7x1xi1>, vector<7x1xf32>
    %162 = arith.addf %134, %161 : vector<7x1xf32>
    %c2_i32_75 = arith.constant 2 : i32
    %163 = tpu.dynamic_rotate %162 by %c2_i32_75 dim 0 : vector<7x1xf32>, i32 -> vector<7x1xf32>
    %c2_i32_76 = arith.constant 2 : i32
    %164 = vector.broadcast %c2_i32_76 : i32 to vector<7x1xi32>
    %165 = arith.cmpi sge, %156, %164 : vector<7x1xi32>
    %cst_77 = arith.constant 0.000000e+00 : f32
    %166 = vector.broadcast %cst_77 : f32 to vector<7x1xf32>
    %167 = arith.select %165, %163, %166 : vector<7x1xi1>, vector<7x1xf32>
    %168 = arith.addf %162, %167 : vector<7x1xf32>
    %c4_i32_78 = arith.constant 4 : i32
    %169 = tpu.dynamic_rotate %168 by %c4_i32_78 dim 0 : vector<7x1xf32>, i32 -> vector<7x1xf32>
    %c4_i32_79 = arith.constant 4 : i32
    %170 = vector.broadcast %c4_i32_79 : i32 to vector<7x1xi32>
    %171 = arith.cmpi sge, %156, %170 : vector<7x1xi32>
    %cst_80 = arith.constant 0.000000e+00 : f32
    %172 = vector.broadcast %cst_80 : f32 to vector<7x1xf32>
    %173 = arith.select %171, %169, %172 : vector<7x1xi1>, vector<7x1xf32>
    %174 = arith.addf %168, %173 : vector<7x1xf32>
    %175 = vector.broadcast %113 : vector<1x1xf32> to vector<7x1xf32>
    %176 = arith.addf %174, %175 : vector<7x1xf32>
    %c4_i32_81 = arith.constant 4 : i32
    %177 = arith.muli %arg1, %c4_i32_81 : i32
    %c1_i32_82 = arith.constant 1 : i32
    %178 = arith.addi %177, %c1_i32_82 : i32
    %c7_i32_83 = arith.constant 7 : i32
    %179 = arith.muli %178, %c7_i32_83 : i32
    %180 = arith.sitofp %179 : i32 to f32
    %181 = vector.broadcast %180 : f32 to vector<7x1xf32>
    %182 = arith.addf %181, %14 : vector<7x1xf32>
    %cst_84 = arith.constant 1.000000e+00 : f32
    %183 = vector.broadcast %cst_84 : f32 to vector<7x1xf32>
    %184 = arith.addf %182, %183 : vector<7x1xf32>
    %cst_85 = arith.constant 8.000000e+00 : f32
    %185 = vector.broadcast %cst_85 : f32 to vector<7x1xf32>
    %186 = arith.mulf %184, %185 : vector<7x1xf32>
    %187 = arith.divf %155, %186 : vector<7x1xf32>
    %188 = arith.divf %176, %186 : vector<7x1xf32>
    %189 = arith.mulf %187, %187 : vector<7x1xf32>
    %190 = arith.subf %188, %189 : vector<7x1xf32>
    %cst_86 = arith.constant 0.000000e+00 : f32
    %191 = vector.broadcast %cst_86 : f32 to vector<7x1xf32>
    %192 = arith.maximumf %190, %191 : vector<7x1xf32>
    %193 = vector.broadcast %187 : vector<7x1xf32> to vector<7x8xf32>
    %194 = arith.subf %129, %193 : vector<7x8xf32>
    %195 = math.sqrt %192 : vector<7x1xf32>
    %cst_87 = arith.constant 9.99999996E-13 : f32
    %196 = vector.broadcast %cst_87 : f32 to vector<7x1xf32>
    %197 = arith.addf %195, %196 : vector<7x1xf32>
    %198 = vector.broadcast %197 : vector<7x1xf32> to vector<7x8xf32>
    %199 = arith.divf %194, %198 : vector<7x8xf32>
    %200 = vector.broadcast %9 : vector<1x8xf32> to vector<7x8xf32>
    %201 = arith.mulf %199, %200 : vector<7x8xf32>
    %202 = vector.broadcast %10 : vector<1x8xf32> to vector<7x8xf32>
    %203 = arith.addf %201, %202 : vector<7x8xf32>
    %204 = arith.truncf %203 : vector<7x8xf32> to vector<7x8xbf16>
    %cst_88 = arith.constant dense<0.000000e+00> : vector<7x32xf32>
    %205 = tpu.matmul %204, %11, %cst_88 {dimension_numbers = #tpu.dot_dimension_numbers<[1], [0], [0], [1], [0, 0, 1, 1], [], []>} : vector<7x8xbf16>, vector<8x32xbf16>, vector<7x32xf32> -> vector<7x32xf32>
    %206 = vector.broadcast %12 : vector<1x32xf32> to vector<7x32xf32>
    %207 = arith.addf %205, %206 : vector<7x32xf32>
    %c0_89 = arith.constant 0 : index
    %c1_90 = arith.constant 1 : index
    %c0_91 = arith.constant 0 : index
    %c0_92 = arith.constant 0 : index
    %208 = vector.load %arg10[%c0_89, %c1_90, %c0_91, %c0_92] : memref<1x4x7x32xf32, #tpu.memory_space<vmem>>, vector<1x1x7x32xf32>
    %209 = vector.shape_cast %208 : vector<1x1x7x32xf32> to vector<7x32xf32>
    %210 = vector.shape_cast %207 : vector<7x32xf32> to vector<1x1x7x32xf32>
    tpu.vector_store %arg10[%c0_89, %c1_90, %c0_91, %c0_92], %210 {strides = array<i32>} : memref<1x4x7x32xf32, #tpu.memory_space<vmem>>, vector<1x1x7x32xf32>,
    %211 = vector.extract_strided_slice %155 {offsets = [6, 0], sizes = [1, 1], strides = [1, 1]} : vector<7x1xf32> to vector<1x1xf32>
    %212 = vector.extract_strided_slice %176 {offsets = [6, 0], sizes = [1, 1], strides = [1, 1]} : vector<7x1xf32> to vector<1x1xf32>
    %c0_93 = arith.constant 0 : index
    %c2_94 = arith.constant 2 : index
    %c0_95 = arith.constant 0 : index
    %c0_96 = arith.constant 0 : index
    %213 = vector.load %arg2[%c0_93, %c2_94, %c0_95, %c0_96] : memref<1x4x8x8xf32, #tpu.memory_space<vmem>>, vector<1x1x8x8xf32>
    %214 = vector.shape_cast %213 : vector<1x1x8x8xf32> to vector<8x8xf32>
    %c0_97 = arith.constant 0 : index
    %c2_98 = arith.constant 2 : index
    %c0_99 = arith.constant 0 : index
    %c0_100 = arith.constant 0 : index
    %215 = vector.load %arg3[%c0_97, %c2_98, %c0_99, %c0_100] : memref<1x4x7x8xf32, #tpu.memory_space<vmem>>, vector<1x1x7x8xf32>
    %216 = vector.shape_cast %215 : vector<1x1x7x8xf32> to vector<7x8xf32>
    %217 = vector.extract_strided_slice %214 {offsets = [0, 0], sizes = [7, 8], strides = [1, 1]} : vector<8x8xf32> to vector<7x8xf32>
    %218 = vector.broadcast %5 : vector<1x8xf32> to vector<7x8xf32>
    %219 = arith.mulf %217, %218 : vector<7x8xf32>
    %220 = vector.broadcast %8 : vector<1x8xf32> to vector<7x8xf32>
    %221 = arith.addf %220, %219 : vector<7x8xf32>
    %222 = vector.broadcast %6 : vector<1x8xf32> to vector<7x8xf32>
    %223 = arith.mulf %216, %222 : vector<7x8xf32>
    %224 = arith.addf %221, %223 : vector<7x8xf32>
    %225 = vector.extract_strided_slice %214 {offsets = [1, 0], sizes = [7, 8], strides = [1, 1]} : vector<8x8xf32> to vector<7x8xf32>
    %226 = vector.broadcast %7 : vector<1x8xf32> to vector<7x8xf32>
    %227 = arith.mulf %225, %226 : vector<7x8xf32>
    %228 = arith.addf %224, %227 : vector<7x8xf32>
    %cst_101 = arith.constant dense<0.000000e+00> : vector<7xf32>
    %229 = vector.multi_reduction <add>, %228, %cst_101 [1] : vector<7x8xf32> to vector<7xf32>
    %230 = vector.shape_cast %229 : vector<7xf32> to vector<7x1xf32>
    %231 = arith.mulf %228, %228 : vector<7x8xf32>
    %cst_102 = arith.constant dense<0.000000e+00> : vector<7xf32>
    %232 = vector.multi_reduction <add>, %231, %cst_102 [1] : vector<7x8xf32> to vector<7xf32>
    %233 = vector.shape_cast %232 : vector<7xf32> to vector<7x1xf32>
    %234 = tpu.iota {dimensions = array<i32: 0>} : vector<7x1xi32>
    %c1_i32_103 = arith.constant 1 : i32
    %235 = tpu.dynamic_rotate %230 by %c1_i32_103 dim 0 : vector<7x1xf32>, i32 -> vector<7x1xf32>
    %c1_i32_104 = arith.constant 1 : i32
    %236 = vector.broadcast %c1_i32_104 : i32 to vector<7x1xi32>
    %237 = arith.cmpi sge, %234, %236 : vector<7x1xi32>
    %cst_105 = arith.constant 0.000000e+00 : f32
    %238 = vector.broadcast %cst_105 : f32 to vector<7x1xf32>
    %239 = arith.select %237, %235, %238 : vector<7x1xi1>, vector<7x1xf32>
    %240 = arith.addf %230, %239 : vector<7x1xf32>
    %c2_i32_106 = arith.constant 2 : i32
    %241 = tpu.dynamic_rotate %240 by %c2_i32_106 dim 0 : vector<7x1xf32>, i32 -> vector<7x1xf32>
    %c2_i32_107 = arith.constant 2 : i32
    %242 = vector.broadcast %c2_i32_107 : i32 to vector<7x1xi32>
    %243 = arith.cmpi sge, %234, %242 : vector<7x1xi32>
    %cst_108 = arith.constant 0.000000e+00 : f32
    %244 = vector.broadcast %cst_108 : f32 to vector<7x1xf32>
    %245 = arith.select %243, %241, %244 : vector<7x1xi1>, vector<7x1xf32>
    %246 = arith.addf %240, %245 : vector<7x1xf32>
    %c4_i32_109 = arith.constant 4 : i32
    %247 = tpu.dynamic_rotate %246 by %c4_i32_109 dim 0 : vector<7x1xf32>, i32 -> vector<7x1xf32>
    %c4_i32_110 = arith.constant 4 : i32
    %248 = vector.broadcast %c4_i32_110 : i32 to vector<7x1xi32>
    %249 = arith.cmpi sge, %234, %248 : vector<7x1xi32>
    %cst_111 = arith.constant 0.000000e+00 : f32
    %250 = vector.broadcast %cst_111 : f32 to vector<7x1xf32>
    %251 = arith.select %249, %247, %250 : vector<7x1xi1>, vector<7x1xf32>
    %252 = arith.addf %246, %251 : vector<7x1xf32>
    %253 = vector.broadcast %211 : vector<1x1xf32> to vector<7x1xf32>
    %254 = arith.addf %252, %253 : vector<7x1xf32>
    %255 = tpu.iota {dimensions = array<i32: 0>} : vector<7x1xi32>
    %c1_i32_112 = arith.constant 1 : i32
    %256 = tpu.dynamic_rotate %233 by %c1_i32_112 dim 0 : vector<7x1xf32>, i32 -> vector<7x1xf32>
    %c1_i32_113 = arith.constant 1 : i32
    %257 = vector.broadcast %c1_i32_113 : i32 to vector<7x1xi32>
    %258 = arith.cmpi sge, %255, %257 : vector<7x1xi32>
    %cst_114 = arith.constant 0.000000e+00 : f32
    %259 = vector.broadcast %cst_114 : f32 to vector<7x1xf32>
    %260 = arith.select %258, %256, %259 : vector<7x1xi1>, vector<7x1xf32>
    %261 = arith.addf %233, %260 : vector<7x1xf32>
    %c2_i32_115 = arith.constant 2 : i32
    %262 = tpu.dynamic_rotate %261 by %c2_i32_115 dim 0 : vector<7x1xf32>, i32 -> vector<7x1xf32>
    %c2_i32_116 = arith.constant 2 : i32
    %263 = vector.broadcast %c2_i32_116 : i32 to vector<7x1xi32>
    %264 = arith.cmpi sge, %255, %263 : vector<7x1xi32>
    %cst_117 = arith.constant 0.000000e+00 : f32
    %265 = vector.broadcast %cst_117 : f32 to vector<7x1xf32>
    %266 = arith.select %264, %262, %265 : vector<7x1xi1>, vector<7x1xf32>
    %267 = arith.addf %261, %266 : vector<7x1xf32>
    %c4_i32_118 = arith.constant 4 : i32
    %268 = tpu.dynamic_rotate %267 by %c4_i32_118 dim 0 : vector<7x1xf32>, i32 -> vector<7x1xf32>
    %c4_i32_119 = arith.constant 4 : i32
    %269 = vector.broadcast %c4_i32_119 : i32 to vector<7x1xi32>
    %270 = arith.cmpi sge, %255, %269 : vector<7x1xi32>
    %cst_120 = arith.constant 0.000000e+00 : f32
    %271 = vector.broadcast %cst_120 : f32 to vector<7x1xf32>
    %272 = arith.select %270, %268, %271 : vector<7x1xi1>, vector<7x1xf32>
    %273 = arith.addf %267, %272 : vector<7x1xf32>
    %274 = vector.broadcast %212 : vector<1x1xf32> to vector<7x1xf32>
    %275 = arith.addf %273, %274 : vector<7x1xf32>
    %c4_i32_121 = arith.constant 4 : i32
    %276 = arith.muli %arg1, %c4_i32_121 : i32
    %c2_i32_122 = arith.constant 2 : i32
    %277 = arith.addi %276, %c2_i32_122 : i32
    %c7_i32_123 = arith.constant 7 : i32
    %278 = arith.muli %277, %c7_i32_123 : i32
    %279 = arith.sitofp %278 : i32 to f32
    %280 = vector.broadcast %279 : f32 to vector<7x1xf32>
    %281 = arith.addf %280, %14 : vector<7x1xf32>
    %cst_124 = arith.constant 1.000000e+00 : f32
    %282 = vector.broadcast %cst_124 : f32 to vector<7x1xf32>
    %283 = arith.addf %281, %282 : vector<7x1xf32>
    %cst_125 = arith.constant 8.000000e+00 : f32
    %284 = vector.broadcast %cst_125 : f32 to vector<7x1xf32>
    %285 = arith.mulf %283, %284 : vector<7x1xf32>
    %286 = arith.divf %254, %285 : vector<7x1xf32>
    %287 = arith.divf %275, %285 : vector<7x1xf32>
    %288 = arith.mulf %286, %286 : vector<7x1xf32>
    %289 = arith.subf %287, %288 : vector<7x1xf32>
    %cst_126 = arith.constant 0.000000e+00 : f32
    %290 = vector.broadcast %cst_126 : f32 to vector<7x1xf32>
    %291 = arith.maximumf %289, %290 : vector<7x1xf32>
    %292 = vector.broadcast %286 : vector<7x1xf32> to vector<7x8xf32>
    %293 = arith.subf %228, %292 : vector<7x8xf32>
    %294 = math.sqrt %291 : vector<7x1xf32>
    %cst_127 = arith.constant 9.99999996E-13 : f32
    %295 = vector.broadcast %cst_127 : f32 to vector<7x1xf32>
    %296 = arith.addf %294, %295 : vector<7x1xf32>
    %297 = vector.broadcast %296 : vector<7x1xf32> to vector<7x8xf32>
    %298 = arith.divf %293, %297 : vector<7x8xf32>
    %299 = vector.broadcast %9 : vector<1x8xf32> to vector<7x8xf32>
    %300 = arith.mulf %298, %299 : vector<7x8xf32>
    %301 = vector.broadcast %10 : vector<1x8xf32> to vector<7x8xf32>
    %302 = arith.addf %300, %301 : vector<7x8xf32>
    %303 = arith.truncf %302 : vector<7x8xf32> to vector<7x8xbf16>
    %cst_128 = arith.constant dense<0.000000e+00> : vector<7x32xf32>
    %304 = tpu.matmul %303, %11, %cst_128 {dimension_numbers = #tpu.dot_dimension_numbers<[1], [0], [0], [1], [0, 0, 1, 1], [], []>} : vector<7x8xbf16>, vector<8x32xbf16>, vector<7x32xf32> -> vector<7x32xf32>
    %305 = vector.broadcast %12 : vector<1x32xf32> to vector<7x32xf32>
    %306 = arith.addf %304, %305 : vector<7x32xf32>
    %c0_129 = arith.constant 0 : index
    %c2_130 = arith.constant 2 : index
    %c0_131 = arith.constant 0 : index
    %c0_132 = arith.constant 0 : index
    %307 = vector.load %arg10[%c0_129, %c2_130, %c0_131, %c0_132] : memref<1x4x7x32xf32, #tpu.memory_space<vmem>>, vector<1x1x7x32xf32>
    %308 = vector.shape_cast %307 : vector<1x1x7x32xf32> to vector<7x32xf32>
    %309 = vector.shape_cast %306 : vector<7x32xf32> to vector<1x1x7x32xf32>
    tpu.vector_store %arg10[%c0_129, %c2_130, %c0_131, %c0_132], %309 {strides = array<i32>} : memref<1x4x7x32xf32, #tpu.memory_space<vmem>>, vector<1x1x7x32xf32>,
    %310 = vector.extract_strided_slice %254 {offsets = [6, 0], sizes = [1, 1], strides = [1, 1]} : vector<7x1xf32> to vector<1x1xf32>
    %311 = vector.extract_strided_slice %275 {offsets = [6, 0], sizes = [1, 1], strides = [1, 1]} : vector<7x1xf32> to vector<1x1xf32>
    %c0_133 = arith.constant 0 : index
    %c3 = arith.constant 3 : index
    %c0_134 = arith.constant 0 : index
    %c0_135 = arith.constant 0 : index
    %312 = vector.load %arg2[%c0_133, %c3, %c0_134, %c0_135] : memref<1x4x8x8xf32, #tpu.memory_space<vmem>>, vector<1x1x8x8xf32>
    %313 = vector.shape_cast %312 : vector<1x1x8x8xf32> to vector<8x8xf32>
    %c0_136 = arith.constant 0 : index
    %c3_137 = arith.constant 3 : index
    %c0_138 = arith.constant 0 : index
    %c0_139 = arith.constant 0 : index
    %314 = vector.load %arg3[%c0_136, %c3_137, %c0_138, %c0_139] : memref<1x4x7x8xf32, #tpu.memory_space<vmem>>, vector<1x1x7x8xf32>
    %315 = vector.shape_cast %314 : vector<1x1x7x8xf32> to vector<7x8xf32>
    %316 = vector.extract_strided_slice %313 {offsets = [0, 0], sizes = [7, 8], strides = [1, 1]} : vector<8x8xf32> to vector<7x8xf32>
    %317 = vector.broadcast %5 : vector<1x8xf32> to vector<7x8xf32>
    %318 = arith.mulf %316, %317 : vector<7x8xf32>
    %319 = vector.broadcast %8 : vector<1x8xf32> to vector<7x8xf32>
    %320 = arith.addf %319, %318 : vector<7x8xf32>
    %321 = vector.broadcast %6 : vector<1x8xf32> to vector<7x8xf32>
    %322 = arith.mulf %315, %321 : vector<7x8xf32>
    %323 = arith.addf %320, %322 : vector<7x8xf32>
    %324 = vector.extract_strided_slice %313 {offsets = [1, 0], sizes = [7, 8], strides = [1, 1]} : vector<8x8xf32> to vector<7x8xf32>
    %325 = vector.broadcast %7 : vector<1x8xf32> to vector<7x8xf32>
    %326 = arith.mulf %324, %325 : vector<7x8xf32>
    %327 = arith.addf %323, %326 : vector<7x8xf32>
    %cst_140 = arith.constant dense<0.000000e+00> : vector<7xf32>
    %328 = vector.multi_reduction <add>, %327, %cst_140 [1] : vector<7x8xf32> to vector<7xf32>
    %329 = vector.shape_cast %328 : vector<7xf32> to vector<7x1xf32>
    %330 = arith.mulf %327, %327 : vector<7x8xf32>
    %cst_141 = arith.constant dense<0.000000e+00> : vector<7xf32>
    %331 = vector.multi_reduction <add>, %330, %cst_141 [1] : vector<7x8xf32> to vector<7xf32>
    %332 = vector.shape_cast %331 : vector<7xf32> to vector<7x1xf32>
    %333 = tpu.iota {dimensions = array<i32: 0>} : vector<7x1xi32>
    %c1_i32_142 = arith.constant 1 : i32
    %334 = tpu.dynamic_rotate %329 by %c1_i32_142 dim 0 : vector<7x1xf32>, i32 -> vector<7x1xf32>
    %c1_i32_143 = arith.constant 1 : i32
    %335 = vector.broadcast %c1_i32_143 : i32 to vector<7x1xi32>
    %336 = arith.cmpi sge, %333, %335 : vector<7x1xi32>
    %cst_144 = arith.constant 0.000000e+00 : f32
    %337 = vector.broadcast %cst_144 : f32 to vector<7x1xf32>
    %338 = arith.select %336, %334, %337 : vector<7x1xi1>, vector<7x1xf32>
    %339 = arith.addf %329, %338 : vector<7x1xf32>
    %c2_i32_145 = arith.constant 2 : i32
    %340 = tpu.dynamic_rotate %339 by %c2_i32_145 dim 0 : vector<7x1xf32>, i32 -> vector<7x1xf32>
    %c2_i32_146 = arith.constant 2 : i32
    %341 = vector.broadcast %c2_i32_146 : i32 to vector<7x1xi32>
    %342 = arith.cmpi sge, %333, %341 : vector<7x1xi32>
    %cst_147 = arith.constant 0.000000e+00 : f32
    %343 = vector.broadcast %cst_147 : f32 to vector<7x1xf32>
    %344 = arith.select %342, %340, %343 : vector<7x1xi1>, vector<7x1xf32>
    %345 = arith.addf %339, %344 : vector<7x1xf32>
    %c4_i32_148 = arith.constant 4 : i32
    %346 = tpu.dynamic_rotate %345 by %c4_i32_148 dim 0 : vector<7x1xf32>, i32 -> vector<7x1xf32>
    %c4_i32_149 = arith.constant 4 : i32
    %347 = vector.broadcast %c4_i32_149 : i32 to vector<7x1xi32>
    %348 = arith.cmpi sge, %333, %347 : vector<7x1xi32>
    %cst_150 = arith.constant 0.000000e+00 : f32
    %349 = vector.broadcast %cst_150 : f32 to vector<7x1xf32>
    %350 = arith.select %348, %346, %349 : vector<7x1xi1>, vector<7x1xf32>
    %351 = arith.addf %345, %350 : vector<7x1xf32>
    %352 = vector.broadcast %310 : vector<1x1xf32> to vector<7x1xf32>
    %353 = arith.addf %351, %352 : vector<7x1xf32>
    %354 = tpu.iota {dimensions = array<i32: 0>} : vector<7x1xi32>
    %c1_i32_151 = arith.constant 1 : i32
    %355 = tpu.dynamic_rotate %332 by %c1_i32_151 dim 0 : vector<7x1xf32>, i32 -> vector<7x1xf32>
    %c1_i32_152 = arith.constant 1 : i32
    %356 = vector.broadcast %c1_i32_152 : i32 to vector<7x1xi32>
    %357 = arith.cmpi sge, %354, %356 : vector<7x1xi32>
    %cst_153 = arith.constant 0.000000e+00 : f32
    %358 = vector.broadcast %cst_153 : f32 to vector<7x1xf32>
    %359 = arith.select %357, %355, %358 : vector<7x1xi1>, vector<7x1xf32>
    %360 = arith.addf %332, %359 : vector<7x1xf32>
    %c2_i32_154 = arith.constant 2 : i32
    %361 = tpu.dynamic_rotate %360 by %c2_i32_154 dim 0 : vector<7x1xf32>, i32 -> vector<7x1xf32>
    %c2_i32_155 = arith.constant 2 : i32
    %362 = vector.broadcast %c2_i32_155 : i32 to vector<7x1xi32>
    %363 = arith.cmpi sge, %354, %362 : vector<7x1xi32>
    %cst_156 = arith.constant 0.000000e+00 : f32
    %364 = vector.broadcast %cst_156 : f32 to vector<7x1xf32>
    %365 = arith.select %363, %361, %364 : vector<7x1xi1>, vector<7x1xf32>
    %366 = arith.addf %360, %365 : vector<7x1xf32>
    %c4_i32_157 = arith.constant 4 : i32
    %367 = tpu.dynamic_rotate %366 by %c4_i32_157 dim 0 : vector<7x1xf32>, i32 -> vector<7x1xf32>
    %c4_i32_158 = arith.constant 4 : i32
    %368 = vector.broadcast %c4_i32_158 : i32 to vector<7x1xi32>
    %369 = arith.cmpi sge, %354, %368 : vector<7x1xi32>
    %cst_159 = arith.constant 0.000000e+00 : f32
    %370 = vector.broadcast %cst_159 : f32 to vector<7x1xf32>
    %371 = arith.select %369, %367, %370 : vector<7x1xi1>, vector<7x1xf32>
    %372 = arith.addf %366, %371 : vector<7x1xf32>
    %373 = vector.broadcast %311 : vector<1x1xf32> to vector<7x1xf32>
    %374 = arith.addf %372, %373 : vector<7x1xf32>
    %c4_i32_160 = arith.constant 4 : i32
    %375 = arith.muli %arg1, %c4_i32_160 : i32
    %c3_i32 = arith.constant 3 : i32
    %376 = arith.addi %375, %c3_i32 : i32
    %c7_i32_161 = arith.constant 7 : i32
    %377 = arith.muli %376, %c7_i32_161 : i32
    %378 = arith.sitofp %377 : i32 to f32
    %379 = vector.broadcast %378 : f32 to vector<7x1xf32>
    %380 = arith.addf %379, %14 : vector<7x1xf32>
    %cst_162 = arith.constant 1.000000e+00 : f32
    %381 = vector.broadcast %cst_162 : f32 to vector<7x1xf32>
    %382 = arith.addf %380, %381 : vector<7x1xf32>
    %cst_163 = arith.constant 8.000000e+00 : f32
    %383 = vector.broadcast %cst_163 : f32 to vector<7x1xf32>
    %384 = arith.mulf %382, %383 : vector<7x1xf32>
    %385 = arith.divf %353, %384 : vector<7x1xf32>
    %386 = arith.divf %374, %384 : vector<7x1xf32>
    %387 = arith.mulf %385, %385 : vector<7x1xf32>
    %388 = arith.subf %386, %387 : vector<7x1xf32>
    %cst_164 = arith.constant 0.000000e+00 : f32
    %389 = vector.broadcast %cst_164 : f32 to vector<7x1xf32>
    %390 = arith.maximumf %388, %389 : vector<7x1xf32>
    %391 = vector.broadcast %385 : vector<7x1xf32> to vector<7x8xf32>
    %392 = arith.subf %327, %391 : vector<7x8xf32>
    %393 = math.sqrt %390 : vector<7x1xf32>
    %cst_165 = arith.constant 9.99999996E-13 : f32
    %394 = vector.broadcast %cst_165 : f32 to vector<7x1xf32>
    %395 = arith.addf %393, %394 : vector<7x1xf32>
    %396 = vector.broadcast %395 : vector<7x1xf32> to vector<7x8xf32>
    %397 = arith.divf %392, %396 : vector<7x8xf32>
    %398 = vector.broadcast %9 : vector<1x8xf32> to vector<7x8xf32>
    %399 = arith.mulf %397, %398 : vector<7x8xf32>
    %400 = vector.broadcast %10 : vector<1x8xf32> to vector<7x8xf32>
    %401 = arith.addf %399, %400 : vector<7x8xf32>
    %402 = arith.truncf %401 : vector<7x8xf32> to vector<7x8xbf16>
    %cst_166 = arith.constant dense<0.000000e+00> : vector<7x32xf32>
    %403 = tpu.matmul %402, %11, %cst_166 {dimension_numbers = #tpu.dot_dimension_numbers<[1], [0], [0], [1], [0, 0, 1, 1], [], []>} : vector<7x8xbf16>, vector<8x32xbf16>, vector<7x32xf32> -> vector<7x32xf32>
    %404 = vector.broadcast %12 : vector<1x32xf32> to vector<7x32xf32>
    %405 = arith.addf %403, %404 : vector<7x32xf32>
    %c0_167 = arith.constant 0 : index
    %c3_168 = arith.constant 3 : index
    %c0_169 = arith.constant 0 : index
    %c0_170 = arith.constant 0 : index
    %406 = vector.load %arg10[%c0_167, %c3_168, %c0_169, %c0_170] : memref<1x4x7x32xf32, #tpu.memory_space<vmem>>, vector<1x1x7x32xf32>
    %407 = vector.shape_cast %406 : vector<1x1x7x32xf32> to vector<7x32xf32>
    %408 = vector.shape_cast %405 : vector<7x32xf32> to vector<1x1x7x32xf32>
    tpu.vector_store %arg10[%c0_167, %c3_168, %c0_169, %c0_170], %408 {strides = array<i32>} : memref<1x4x7x32xf32, #tpu.memory_space<vmem>>, vector<1x1x7x32xf32>,
    %409 = vector.extract_strided_slice %353 {offsets = [6, 0], sizes = [1, 1], strides = [1, 1]} : vector<7x1xf32> to vector<1x1xf32>
    %410 = vector.extract_strided_slice %374 {offsets = [6, 0], sizes = [1, 1], strides = [1, 1]} : vector<7x1xf32> to vector<1x1xf32>
    %c0_171 = arith.constant 0 : index
    %c0_172 = arith.constant 0 : index
    %411 = vector.load %arg11[%c0_171, %c0_172] : memref<1x2xf32, #tpu.memory_space<vmem>>, vector<1x1xf32>
    tpu.vector_store %arg11[%c0_171, %c0_172], %409 {strides = array<i32>} : memref<1x2xf32, #tpu.memory_space<vmem>>, vector<1x1xf32>,
    %c0_173 = arith.constant 0 : index
    %c1_174 = arith.constant 1 : index
    %412 = vector.load %arg11[%c0_173, %c1_174] : memref<1x2xf32, #tpu.memory_space<vmem>>, vector<1x1xf32>
    tpu.vector_store %arg11[%c0_173, %c1_174], %410 {strides = array<i32>} : memref<1x2xf32, #tpu.memory_space<vmem>>, vector<1x1xf32>,
    return
  }
  func.func @transform_0(%arg0: i32, %arg1: i32) -> (i32, i32, i32, i32) {
    %c0_i32 = arith.constant 0 : i32
    %c0_i32_0 = arith.constant 0 : i32
    %c0_i32_1 = arith.constant 0 : i32
    return %arg0, %arg1, %c0_i32, %c0_i32_0 : i32, i32, i32, i32
  }
  func.func @transform_1(%arg0: i32, %arg1: i32) -> (i32, i32, i32, i32) {
    %c0_i32 = arith.constant 0 : i32
    %c0_i32_0 = arith.constant 0 : i32
    %c0_i32_1 = arith.constant 0 : i32
    return %arg0, %arg1, %c0_i32, %c0_i32_0 : i32, i32, i32, i32
  }
  func.func @transform_2(%arg0: i32, %arg1: i32) -> (i32, i32) {
    %c0_i32 = arith.constant 0 : i32
    %c0_i32_0 = arith.constant 0 : i32
    %c0_i32_1 = arith.constant 0 : i32
    return %c0_i32, %c0_i32_0 : i32, i32
  }
  func.func @transform_3(%arg0: i32, %arg1: i32) -> (i32, i32) {
    %c0_i32 = arith.constant 0 : i32
    %c0_i32_0 = arith.constant 0 : i32
    %c0_i32_1 = arith.constant 0 : i32
    return %c0_i32, %c0_i32_0 : i32, i32
  }
  func.func @transform_4(%arg0: i32, %arg1: i32) -> (i32, i32) {
    %c0_i32 = arith.constant 0 : i32
    %c0_i32_0 = arith.constant 0 : i32
    %c0_i32_1 = arith.constant 0 : i32
    return %c0_i32, %c0_i32_0 : i32, i32
  }
  func.func @transform_5(%arg0: i32, %arg1: i32) -> (i32, i32) {
    %c0_i32 = arith.constant 0 : i32
    %c0_i32_0 = arith.constant 0 : i32
    %c0_i32_1 = arith.constant 0 : i32
    return %c0_i32, %c0_i32_0 : i32, i32
  }
  func.func @transform_6(%arg0: i32, %arg1: i32) -> (i32, i32) {
    %c0_i32 = arith.constant 0 : i32
    %c0_i32_0 = arith.constant 0 : i32
    %c0_i32_1 = arith.constant 0 : i32
    return %c0_i32, %c0_i32_0 : i32, i32
  }
  func.func @transform_7(%arg0: i32, %arg1: i32) -> (i32, i32) {
    %c0_i32 = arith.constant 0 : i32
    %c0_i32_0 = arith.constant 0 : i32
    %c0_i32_1 = arith.constant 0 : i32
    return %c0_i32, %c0_i32_0 : i32, i32
  }
  func.func @transform_8(%arg0: i32, %arg1: i32) -> (i32, i32, i32, i32) {
    %c0_i32 = arith.constant 0 : i32
    %c0_i32_0 = arith.constant 0 : i32
    %c0_i32_1 = arith.constant 0 : i32
    return %arg0, %arg1, %c0_i32, %c0_i32_0 : i32, i32, i32, i32
  }
}

</mosaic_0001>

<llo_original>
// kernel: depthwise_separable_conv2d.1
$region0: #{depthwise_separable_conv2d.1}
  #allocation0 [shape = 'u32[]', space=smem, size = 0x4, offset = 0x4, fixed_abs, tag = 'smem constant byte address 0x4 - core index']
  #allocation1 [shape = 'u32[144,128]{1,0:T(1,128)}', space=vmem, size = 0x12000, scoped, tag = 'internal scratch']
  #allocation2 [shape = 'f32[1,2]{1,0:T(1,128)}', space=vmem, size = 0x200, scoped, tag = 'scratch operand']
  %s0 = inlined_call_operand.vmem [shape: f32[2,8,8,8], index: 0, kind: input, shape index: {}]
  %s1 = inlined_call_operand.vmem [shape: f32[2,8,7,8], index: 1, kind: input, shape index: {}]
  %s2 = inlined_call_operand.vmem [shape: f32[3,8], index: 2, kind: input, shape index: {}]
  %s3 = inlined_call_operand.vmem [shape: f32[1,8], index: 3, kind: input, shape index: {}]
  %s4 = inlined_call_operand.vmem [shape: f32[1,8], index: 4, kind: input, shape index: {}]
  %s5 = inlined_call_operand.vmem [shape: f32[1,8], index: 5, kind: input, shape index: {}]
  %s6 = inlined_call_operand.vmem [shape: bf16[8,32], index: 6, kind: input, shape index: {}]
  %s7 = inlined_call_operand.vmem [shape: f32[1,32], index: 7, kind: input, shape index: {}]
  %s8 = inlined_call_operand.vmem [shape: f32[2,8,7,32], index: 8, kind: output, shape index: {}]
  %s9 = sld [smem:[#allocation0]]
  $region69: #{depthwise_separable_conv2d.1} parent=0
    _
  %s11 = ssub.s32 1, %s9
  %s12 = scalar_select 0, %s11, %s9
  loop: start=0, step=1, limit=6
  $region2: #{depthwise_separable_conv2d.1} parent=0 // loop_pre_header
    _
  $region3: #{depthwise_separable_conv2d.1} parent=0 // loop_header
    %s14 = sphi 0, %s18
    %p15 = scmp.ge.s32.totalorder %s14, 6
    %s21 = sphi 0, %s33
    %s22 = sphi 0, %s29
    %s23 = sphi 0, %s21
    %s24 = sphi 0, %s22
    %s25 = sphi 0, %s23
    %s26 = sphi 0, %s24
    %s38 = sphi 0, %s40
    %s41 = sphi 0, %s38
    %s42 = sphi 0, %s41
    %s58 = sphi 0, %s42
    %s66 = sphi 0, %s68
    %s69 = sphi 0, %s66
    %s70 = sphi 0, %s69
    %s86 = sphi 0, %s70
    %s90 = sphi 0, %s90
    %s92 = sphi 0, %s90
    %s93 = sphi 0, %s92
    %s107 = sphi 0, %s93
    %s111 = sphi 0, %s111
    %s113 = sphi 0, %s111
    %s114 = sphi 0, %s113
    %s128 = sphi 0, %s114
    %s132 = sphi 0, %s132
    %s134 = sphi 0, %s132
    %s135 = sphi 0, %s134
    %s149 = sphi 0, %s135
    %s153 = sphi 0, %s153
    %s155 = sphi 0, %s153
    %s156 = sphi 0, %s155
    %s170 = sphi 0, %s156
    %s174 = sphi 0, %s174
    %s176 = sphi 0, %s174
    %s177 = sphi 0, %s176
    %s191 = sphi 0, %s177
    %s195 = sphi 0, %s195
    %s197 = sphi 0, %s195
    %s198 = sphi 0, %s197
    %s212 = sphi 0, %s198
    %s220 = sphi 0, %s222
    %s223 = sphi 0, %s220
    %s224 = sphi 0, %s223
    %s240 = sphi 0, %s224
  $region4: #{depthwise_separable_conv2d.1} parent=0 // loop_header_branch
    %17 = sbr.rel (%p15) target = $region8
  $region5: #{depthwise_separable_conv2d.1} parent=0 // loop_body
    %s19 = ssub.s32 %s14, 1
    %s20 = ssub.s32 %s14, 2
    %s27 = sadd.s32 1, %s22
    %p28 = scmp.ge.s32.totalorder %s27, 2
    %s29 = scalar_select %p28, 0, %s27
    %s30 = sadd.s32 1, %s21
    %s31 = scalar_select %p28, %s30, %s21
    %p32 = scmp.ge.s32.totalorder %s31, 2
    %s33 = scalar_select %p32, 0, %s31
    %s34 = ssub.s32 %s21, %s33
    %s35 = ssub.s32 %s22, %s29
    %s36 = sor.u32 %s34, %s35
    %p37 = scmp.eq.s32.totalorder %s36, 0
    %s39 = sadd.s32 %s38, 1
    %s40 = scalar_select %p37, %s38, %s39
    %p43 = pneg %p37
    %p44 = scmp.eq.s32.totalorder %s14, 3
    %p45 = por %p43, %p44
    %p46 = scmp.ne.s32.totalorder %s38, %s41
    %p47 = scmp.eq.s32.totalorder %s14, 0
    %p48 = por %p46, %p47
    %p49 = scmp.ne.s32.totalorder %s38, %s41
    %p50 = scmp.eq.s32.totalorder %s19, 3
    %p51 = por %p49, %p50
    %p52 = scmp.ne.s32.totalorder %s41, %s42
    %p53 = scmp.eq.s32.totalorder %s19, 0
    %p54 = por %p52, %p53
    %p55 = scmp.ne.s32.totalorder %s41, %s42
    %p56 = scmp.eq.s32.totalorder %s20, 3
    %p57 = por %p55, %p56
    %p59 = scmp.ne.s32.totalorder %s42, %s58
    %p60 = scmp.eq.s32.totalorder %s20, 0
    %p61 = por %p59, %p60
    %s62 = ssub.s32 %s21, %s33
    %s63 = ssub.s32 %s22, %s29
    %s64 = sor.u32 %s62, %s63
    %p65 = scmp.eq.s32.totalorder %s64, 0
    %s67 = sadd.s32 %s66, 1
    %s68 = scalar_select %p65, %s66, %s67
    %p71 = pneg %p65
    %p72 = scmp.eq.s32.totalorder %s14, 3
    %p73 = por %p71, %p72
    %p74 = scmp.ne.s32.totalorder %s66, %s69
    %p75 = scmp.eq.s32.totalorder %s14, 0
    %p76 = por %p74, %p75
    %p77 = scmp.ne.s32.totalorder %s66, %s69
    %p78 = scmp.eq.s32.totalorder %s19, 3
    %p79 = por %p77, %p78
    %p80 = scmp.ne.s32.totalorder %s69, %s70
    %p81 = scmp.eq.s32.totalorder %s19, 0
    %p82 = por %p80, %p81
    %p83 = scmp.ne.s32.totalorder %s69, %s70
    %p84 = scmp.eq.s32.totalorder %s20, 3
    %p85 = por %p83, %p84
    %p87 = scmp.ne.s32.totalorder %s70, %s86
    %p88 = scmp.eq.s32.totalorder %s20, 0
    %p89 = por %p87, %p88
    %s91 = sadd.s32 %s90, 1
    %p94 = scmp.eq.s32.totalorder %s14, 3
    %p95 = scmp.ne.s32.totalorder %s90, %s92
    %p96 = scmp.eq.s32.totalorder %s14, 0
    %p97 = por %p95, %p96
    %p98 = scmp.ne.s32.totalorder %s90, %s92
    %p99 = scmp.eq.s32.totalorder %s19, 3
    %p100 = por %p98, %p99
    %p101 = scmp.ne.s32.totalorder %s92, %s93
    %p102 = scmp.eq.s32.totalorder %s19, 0
    %p103 = por %p101, %p102
    %p104 = scmp.ne.s32.totalorder %s92, %s93
    %p105 = scmp.eq.s32.totalorder %s20, 3
    %p106 = por %p104, %p105
    %p108 = scmp.ne.s32.totalorder %s93, %s107
    %p109 = scmp.eq.s32.totalorder %s20, 0
    %p110 = por %p108, %p109
    %s112 = sadd.s32 %s111, 1
    %p115 = scmp.eq.s32.totalorder %s14, 3
    %p116 = scmp.ne.s32.totalorder %s111, %s113
    %p117 = scmp.eq.s32.totalorder %s14, 0
    %p118 = por %p116, %p117
    %p119 = scmp.ne.s32.totalorder %s111, %s113
    %p120 = scmp.eq.s32.totalorder %s19, 3
    %p121 = por %p119, %p120
    %p122 = scmp.ne.s32.totalorder %s113, %s114
    %p123 = scmp.eq.s32.totalorder %s19, 0
    %p124 = por %p122, %p123
    %p125 = scmp.ne.s32.totalorder %s113, %s114
    %p126 = scmp.eq.s32.totalorder %s20, 3
    %p127 = por %p125, %p126
    %p129 = scmp.ne.s32.totalorder %s114, %s128
    %p130 = scmp.eq.s32.totalorder %s20, 0
    %p131 = por %p129, %p130
    %s133 = sadd.s32 %s132, 1
    %p136 = scmp.eq.s32.totalorder %s14, 3
    %p137 = scmp.ne.s32.totalorder %s132, %s134
    %p138 = scmp.eq.s32.totalorder %s14, 0
    %p139 = por %p137, %p138
    %p140 = scmp.ne.s32.totalorder %s132, %s134
    %p141 = scmp.eq.s32.totalorder %s19, 3
    %p142 = por %p140, %p141
    %p143 = scmp.ne.s32.totalorder %s134, %s135
    %p144 = scmp.eq.s32.totalorder %s19, 0
    %p145 = por %p143, %p144
    %p146 = scmp.ne.s32.totalorder %s134, %s135
    %p147 = scmp.eq.s32.totalorder %s20, 3
    %p148 = por %p146, %p147
    %p150 = scmp.ne.s32.totalorder %s135, %s149
    %p151 = scmp.eq.s32.totalorder %s20, 0
    %p152 = por %p150, %p151
    %s154 = sadd.s32 %s153, 1
    %p157 = scmp.eq.s32.totalorder %s14, 3
    %p158 = scmp.ne.s32.totalorder %s153, %s155
    %p159 = scmp.eq.s32.totalorder %s14, 0
    %p160 = por %p158, %p159
    %p161 = scmp.ne.s32.totalorder %s153, %s155
    %p162 = scmp.eq.s32.totalorder %s19, 3
    %p163 = por %p161, %p162
    %p164 = scmp.ne.s32.totalorder %s155, %s156
    %p165 = scmp.eq.s32.totalorder %s19, 0
    %p166 = por %p164, %p165
    %p167 = scmp.ne.s32.totalorder %s155, %s156
    %p168 = scmp.eq.s32.totalorder %s20, 3
    %p169 = por %p167, %p168
    %p171 = scmp.ne.s32.totalorder %s156, %s170
    %p172 = scmp.eq.s32.totalorder %s20, 0
    %p173 = por %p171, %p172
    %s175 = sadd.s32 %s174, 1
    %p178 = scmp.eq.s32.totalorder %s14, 3
    %p179 = scmp.ne.s32.totalorder %s174, %s176
    %p180 = scmp.eq.s32.totalorder %s14, 0
    %p181 = por %p179, %p180
    %p182 = scmp.ne.s32.totalorder %s174, %s176
    %p183 = scmp.eq.s32.totalorder %s19, 3
    %p184 = por %p182, %p183
    %p185 = scmp.ne.s32.totalorder %s176, %s177
    %p186 = scmp.eq.s32.totalorder %s19, 0
    %p187 = por %p185, %p186
    %p188 = scmp.ne.s32.totalorder %s176, %s177
    %p189 = scmp.eq.s32.totalorder %s20, 3
    %p190 = por %p188, %p189
    %p192 = scmp.ne.s32.totalorder %s177, %s191
    %p193 = scmp.eq.s32.totalorder %s20, 0
    %p194 = por %p192, %p193
    %s196 = sadd.s32 %s195, 1
    %p199 = scmp.eq.s32.totalorder %s14, 3
    %p200 = scmp.ne.s32.totalorder %s195, %s197
    %p201 = scmp.eq.s32.totalorder %s14, 0
    %p202 = por %p200, %p201
    %p203 = scmp.ne.s32.totalorder %s195, %s197
    %p204 = scmp.eq.s32.totalorder %s19, 3
    %p205 = por %p203, %p204
    %p206 = scmp.ne.s32.totalorder %s197, %s198
    %p207 = scmp.eq.s32.totalorder %s19, 0
    %p208 = por %p206, %p207
    %p209 = scmp.ne.s32.totalorder %s197, %s198
    %p210 = scmp.eq.s32.totalorder %s20, 3
    %p211 = por %p209, %p210
    %p213 = scmp.ne.s32.totalorder %s198, %s212
    %p214 = scmp.eq.s32.totalorder %s20, 0
    %p215 = por %p213, %p214
    %s216 = ssub.s32 %s21, %s33
    %s217 = ssub.s32 %s22, %s29
    %s218 = sor.u32 %s216, %s217
    %p219 = scmp.eq.s32.totalorder %s218, 0
    %s221 = sadd.s32 %s220, 1
    %s222 = scalar_select %p219, %s220, %s221
    %p225 = pneg %p219
    %p226 = scmp.eq.s32.totalorder %s14, 3
    %p227 = por %p225, %p226
    %p228 = scmp.ne.s32.totalorder %s220, %s223
    %p229 = scmp.eq.s32.totalorder %s14, 0
    %p230 = por %p228, %p229
    %p231 = scmp.ne.s32.totalorder %s220, %s223
    %p232 = scmp.eq.s32.totalorder %s19, 3
    %p233 = por %p231, %p232
    %p234 = scmp.ne.s32.totalorder %s223, %s224
    %p235 = scmp.eq.s32.totalorder %s19, 0
    %p236 = por %p234, %p235
    %p237 = scmp.ne.s32.totalorder %s223, %s224
    %p238 = scmp.eq.s32.totalorder %s20, 3
    %p239 = por %p237, %p238
    %p241 = scmp.ne.s32.totalorder %s224, %s240
    %p242 = scmp.eq.s32.totalorder %s20, 0
    %p243 = por %p241, %p242
    %p244 = scmp.le.s32.totalorder 1, %s14
    %p245 = scmp.lt.s32.totalorder %s14, 5
    %p246 = pnand %p244, %p245
    %p247 = pneg %p246
    // Predicated region
    $region9: #{depthwise_separable_conv2d.1} parent=5 // pred_check
      _
    $region10: #{depthwise_separable_conv2d.1} parent=5 // pred_check_branch
      %249 = sbr.rel (%p246) target = $region12
    $region11: #{depthwise_separable_conv2d.1} parent=5 // pred_region
      %s250 = ssub.s32 %s14, 1
      // Predicated region
      $region13: #{depthwise_separable_conv2d.1} parent=11 // pred_check
        %p251 = pneg %p103
      $region14: #{depthwise_separable_conv2d.1} parent=11 // pred_check_branch
        %253 = sbr.rel (%p251) target = $region16
      $region15: #{depthwise_separable_conv2d.1} parent=11 // pred_region
        _
      $region16: #{depthwise_separable_conv2d.1} parent=11 // pred_fallthru
        _
      // Predicated region
      $region17: #{depthwise_separable_conv2d.1} parent=11 // pred_check
        %p254 = pneg %p124
      $region18: #{depthwise_separable_conv2d.1} parent=11 // pred_check_branch
        %256 = sbr.rel (%p254) target = $region20
      $region19: #{depthwise_separable_conv2d.1} parent=11 // pred_region
        _
      $region20: #{depthwise_separable_conv2d.1} parent=11 // pred_fallthru
        _
      // Predicated region
      $region21: #{depthwise_separable_conv2d.1} parent=11 // pred_check
        %p257 = pneg %p145
      $region22: #{depthwise_separable_conv2d.1} parent=11 // pred_check_branch
        %259 = sbr.rel (%p257) target = $region24
      $region23: #{depthwise_separable_conv2d.1} parent=11 // pred_region
        _
      $region24: #{depthwise_separable_conv2d.1} parent=11 // pred_fallthru
        _
      // Predicated region
      $region25: #{depthwise_separable_conv2d.1} parent=11 // pred_check
        %p260 = pneg %p166
      $region26: #{depthwise_separable_conv2d.1} parent=11 // pred_check_branch
        %262 = sbr.rel (%p260) target = $region28
      $region27: #{depthwise_separable_conv2d.1} parent=11 // pred_region
        _
      $region28: #{depthwise_separable_conv2d.1} parent=11 // pred_fallthru
        _
      // Predicated region
      $region29: #{depthwise_separable_conv2d.1} parent=11 // pred_check
        %p263 = pneg %p187
      $region30: #{depthwise_separable_conv2d.1} parent=11 // pred_check_branch
        %265 = sbr.rel (%p263) target = $region32
      $region31: #{depthwise_separable_conv2d.1} parent=11 // pred_region
        _
      $region32: #{depthwise_separable_conv2d.1} parent=11 // pred_fallthru
        _
      // Predicated region
      $region33: #{depthwise_separable_conv2d.1} parent=11 // pred_check
        %p266 = pneg %p208
      $region34: #{depthwise_separable_conv2d.1} parent=11 // pred_check_branch
        %268 = sbr.rel (%p266) target = $region36
      $region35: #{depthwise_separable_conv2d.1} parent=11 // pred_region
        _
      $region36: #{depthwise_separable_conv2d.1} parent=11 // pred_fallthru
        _
    $region12: #{depthwise_separable_conv2d.1} parent=5 // pred_fallthru
      _
    %p269 = scmp.lt.s32.totalorder %s14, 4
    // Predicated region
    $region37: #{depthwise_separable_conv2d.1} parent=5 // pred_check
      %p270 = pneg %p269
    $region38: #{depthwise_separable_conv2d.1} parent=5 // pred_check_branch
      %272 = sbr.rel (%p270) target = $region40
    $region39: #{depthwise_separable_conv2d.1} parent=5 // pred_region
      // Predicated region
      $region41: #{depthwise_separable_conv2d.1} parent=39 // pred_check
        %p273 = pneg %p48
      $region42: #{depthwise_separable_conv2d.1} parent=39 // pred_check_branch
        %275 = sbr.rel (%p273) target = $region44
      $region43: #{depthwise_separable_conv2d.1} parent=39 // pred_region
        %s276 = smul.u32 4, %s22
        %p277 = scmp.lt.s32.totalorder %s21, 1
        %s278 = scalar_select %p277, %s21, 1
        %p279 = scmp.lt.s32.totalorder %s276, 7
        %s280 = scalar_select %p279, %s276, 7
        %s281 = smul.addr %s278, 8
        %s282 = sadd.s32 %s280, %s281
        %s283 = smul.addr %s282, 8
        %s284 = scalar_lea.vmem %s0, %s283
        %s285 = smul.u32 4, %s22
      $region44: #{depthwise_separable_conv2d.1} parent=39 // pred_fallthru
        _
      // Predicated region
      $region45: #{depthwise_separable_conv2d.1} parent=39 // pred_check
        %p286 = pneg %p76
      $region46: #{depthwise_separable_conv2d.1} parent=39 // pred_check_branch
        %288 = sbr.rel (%p286) target = $region48
      $region47: #{depthwise_separable_conv2d.1} parent=39 // pred_region
        %s289 = smul.u32 4, %s22
        %p290 = scmp.lt.s32.totalorder %s21, 1
        %s291 = scalar_select %p290, %s21, 1
        %p292 = scmp.lt.s32.totalorder %s289, 7
        %s293 = scalar_select %p292, %s289, 7
        %s294 = smul.addr %s291, 8
        %s295 = sadd.s32 %s293, %s294
        %s296 = smul.addr %s295, 8
        %s297 = scalar_lea.vmem %s1, %s296
        %s298 = smul.u32 4, %s22
      $region48: #{depthwise_separable_conv2d.1} parent=39 // pred_fallthru
        _
    $region40: #{depthwise_separable_conv2d.1} parent=5 // pred_fallthru
      _
    %p299 = scmp.le.s32.totalorder 1, %s14
    %p300 = scmp.lt.s32.totalorder %s14, 5
    %p301 = pnand %p299, %p300
    %p302 = pneg %p301
    // Predicated region
    $region49: #{depthwise_separable_conv2d.1} parent=5 // pred_check
      _
    $region50: #{depthwise_separable_conv2d.1} parent=5 // pred_check_branch
      %304 = sbr.rel (%p301) target = $region52
    $region51: #{depthwise_separable_conv2d.1} parent=5 // pred_region
      %s305 = ssub.s32 %s14, 1
      %s306 = smul.u32 4, %s24
      %p307 = scmp.lt.s32.totalorder %s23, 1
      %s308 = scalar_select %p307, %s23, 1
      %p309 = scmp.lt.s32.totalorder %s306, 7
      %s310 = scalar_select %p309, %s306, 7
      %s311 = smul.addr %s308, 8
      %s312 = sadd.s32 %s310, %s311
      %s313 = smul.addr %s312, 8
      %s314 = scalar_lea.vmem %s0, %s313
      %p315 = pneg %p54
      %p316 = pneg %p51
      %s317 = smul.u32 4, %s24
      %p318 = scmp.lt.s32.totalorder %s23, 1
      %s319 = scalar_select %p318, %s23, 1
      %p320 = scmp.lt.s32.totalorder %s317, 7
      %s321 = scalar_select %p320, %s317, 7
      %s322 = smul.addr %s319, 8
      %s323 = sadd.s32 %s321, %s322
      %s324 = smul.addr %s323, 8
      %s325 = scalar_lea.vmem %s1, %s324
      %p326 = pneg %p82
      %p327 = pneg %p79
      %p328 = pneg %p103
      %p329 = pneg %p100
      %p330 = pneg %p124
      %p331 = pneg %p121
      %p332 = pneg %p145
      %p333 = pneg %p142
      %p334 = pneg %p166
      %p335 = pneg %p163
      %p336 = pneg %p187
      %p337 = pneg %p184
      %p338 = pneg %p208
      %p339 = pneg %p205
      %p340 = pneg %p236
      %p341 = pneg %p233
      %s342 = smul.u32 4, %s24
      %p343 = scmp.lt.s32.totalorder %s23, 1
      %s344 = scalar_select %p343, %s23, 1
      %p345 = scmp.lt.s32.totalorder %s342, 7
      %s346 = scalar_select %p345, %s342, 7
      %s347 = smul.addr %s344, 8
      %s348 = sadd.s32 %s346, %s347
      %s349 = smul.addr %s348, 8
      %s350 = scalar_lea.vmem %s8, %s349
      %s351 = smul.u32 4, %s24
      %p352 = scmp.lt.s32.totalorder %s23, 1
      %s353 = scalar_select %p352, %s23, 1
      %p354 = scmp.lt.s32.totalorder %s351, 7
      %s355 = scalar_select %p354, %s351, 7
      %s356 = smul.addr %s353, 8
      %s357 = sadd.s32 %s355, %s356
      %s358 = smul.addr %s357, 8
      %s359 = scalar_lea.vmem %s0, %s358
      %s360 = smul.u32 4, %s24
      %s361 = smul.u32 4, %s24
      %p362 = scmp.lt.s32.totalorder %s23, 1
      %s363 = scalar_select %p362, %s23, 1
      %p364 = scmp.lt.s32.totalorder %s361, 7
      %s365 = scalar_select %p364, %s361, 7
      %s366 = smul.addr %s363, 8
      %s367 = sadd.s32 %s365, %s366
      %s368 = smul.addr %s367, 8
      %s369 = scalar_lea.vmem %s1, %s368
      %s370 = smul.u32 4, %s24
      %s371 = smul.u32 4, %s24
      %p372 = scmp.lt.s32.totalorder %s23, 1
      %s373 = scalar_select %p372, %s23, 1
      %p374 = scmp.lt.s32.totalorder %s371, 7
      %s375 = scalar_select %p374, %s371, 7
      %s376 = smul.addr %s373, 8
      %s377 = sadd.s32 %s375, %s376
      %s378 = smul.addr %s377, 8
      %s379 = scalar_lea.vmem %s8, %s378
      %s380 = smul.u32 4, %s24
      %p382 = scmp.eq.s32.totalorder %s24, 0
      // Predicated region
      $region53: #{depthwise_separable_conv2d.1} parent=51 // pred_check
        %p383 = pneg %p382
      $region54: #{depthwise_separable_conv2d.1} parent=51 // pred_check_branch
        %385 = sbr.rel (%p383) target = $region56
      $region55: #{depthwise_separable_conv2d.1} parent=51 // pred_region
        %vm386 = vcmask 8192
        %387 = vst.msk [vmem:[#allocation2] sm:$0x1] %vm386, 0.0
      $region56: #{depthwise_separable_conv2d.1} parent=51 // pred_fallthru
        _
      %v388 = vld [vmem:[#allocation2] sm:$0x1]
      %v389 = vld [vmem:[%s2] sm:$0x1]
      %v390 = vld [vmem:[%s2 + $0x1] sm:$0x1]
      %v391 = vld [vmem:[%s2 + $0x2] sm:$0x1]
      %v392 = vld [vmem:[%s3] sm:$0x1]
      %v393 = vld [vmem:[%s4] sm:$0x1]
      %v394 = vld [vmem:[%s5] sm:$0x1]
      %v395 = vld [vmem:[%s6] sm:$0xf]
      %v396 = vld [vmem:[%s7] sm:$0x1]
      %v397 = vlaneseq
      %v398 = vshrl.u32 %v397, 7
      %v399 = vcvt.s32.f32 %v398
      %v400 = vld [vmem:[%s359] sm:$0xff]
      %v401 = vld [vmem:[%s369] sm:$0x7f]
      %v402 = vlaneseq
      %v403 = vshrl.u32 %v402, 7
      %v404 = vsub.s32 0, %v403
      %v405 = vrot.slane %v389, %v404
      %v406 = vmul.f32 %v400, %v405
      %v408 = vlaneseq
      %v409 = vshrl.u32 %v408, 7
      %v410 = vsub.s32 0, %v409
      %v411 = vrot.slane %v392, %v410
      %v413 = vadd.f32 %v411, %v406
      %v414 = vlaneseq
      %v415 = vshrl.u32 %v414, 7
      %v416 = vsub.s32 0, %v415
      %v417 = vrot.slane %v390, %v416
      %v418 = vmul.f32 %v401, %v417
      %v419 = vadd.f32 %v413, %v418
      %v420 = vlaneseq
      %v421 = vshrl.u32 %v420, 7
      %v422 = vsub.s32 0, %v421
      %v423 = vrot.slane %v391, %v422
      %v424 = vmul.f32 %v400, %v423
      %v426 = vrot.slane %v424, 1
      %v428 = vadd.f32 %v419, %v426
      %vm429 = vcmask 63488
      %v430 = vsel %vm429, %v428, 0.0
      %431 = vadd.xlane.f32.xlu0 %v430
      %v432 = vpop.xlane.xlu0 %431
      %v433 = vmul.f32 %v428, %v428
      %v434 = vsel %vm429, %v433, 0.0
      %435 = vadd.xlane.f32.xlu0 %v434
      %v436 = vpop.xlane.xlu0 %435
      %vm437 = vcmask 1047559
      %v438 = vrot.slane %v432, 1
      %v439 = vsel %vm437, %v438, %v432
      %v440 = vrot.slane %v439, 1
      %v441 = vsel %vm437, %v440, %v432
      %vm442 = vcmp.ge.s32.totalorder %v398, 1
      %vm445 = vcmask 1041408
      %v446 = vrot.slane %v441, 6
      %v447 = vrot.slane %v440, 6
      %v448 = vsel %vm445, %v446, %v447
      %v450 = vsel %vm442, %v448, 0.0
      %v451 = vadd.f32 %v432, %v450
      %v452 = vrot.slane %v451, 1
      %v453 = vsel %vm437, %v452, %v451
      %v454 = vrot.slane %v453, 1
      %v455 = vsel %vm437, %v454, %v451
      %vm456 = vcmp.ge.s32.totalorder %v398, 2
      %vm459 = vcmask 1042432
      %v460 = vrot.slane %v455, 5
      %v461 = vrot.slane %v454, 5
      %v462 = vsel %vm459, %v460, %v461
      %v464 = vsel %vm456, %v462, 0.0
      %v465 = vadd.f32 %v451, %v464
      %v466 = vrot.slane %v465, 1
      %v467 = vsel %vm437, %v466, %v465
      %v468 = vrot.slane %v467, 1
      %v469 = vsel %vm437, %v468, %v465
      %vm470 = vcmp.ge.s32.totalorder %v398, 4
      %vm473 = vcmask 1044480
      %v474 = vrot.slane %v469, 3
      %v475 = vrot.slane %v468, 3
      %v476 = vsel %vm473, %v474, %v475
      %v478 = vsel %vm470, %v476, 0.0
      %v479 = vadd.f32 %v465, %v478
      %v481 = vlaneseq
      %v482 = vshrl.u32 %v481, 7
      %v483 = vsub.s32 0, %v482
      %v484 = vrot.slane %v388, %v483
      %v486 = vadd.f32 %v479, %v484
      %v487 = vrot.slane %v436, 1
      %v488 = vsel %vm437, %v487, %v436
      %v489 = vrot.slane %v488, 1
      %v490 = vsel %vm437, %v489, %v436
      %v493 = vrot.slane %v490, 6
      %v494 = vrot.slane %v489, 6
      %v495 = vsel %vm445, %v493, %v494
      %v497 = vsel %vm442, %v495, 0.0
      %v498 = vadd.f32 %v436, %v497
      %v499 = vrot.slane %v498, 1
      %v500 = vsel %vm437, %v499, %v498
      %v501 = vrot.slane %v500, 1
      %v502 = vsel %vm437, %v501, %v498
      %v505 = vrot.slane %v502, 5
      %v506 = vrot.slane %v501, 5
      %v507 = vsel %vm459, %v505, %v506
      %v509 = vsel %vm456, %v507, 0.0
      %v510 = vadd.f32 %v498, %v509
      %v511 = vrot.slane %v510, 1
      %v512 = vsel %vm437, %v511, %v510
      %v513 = vrot.slane %v512, 1
      %v514 = vsel %vm437, %v513, %v510
      %v517 = vrot.slane %v514, 3
      %v518 = vrot.slane %v513, 3
      %v519 = vsel %vm473, %v517, %v518
      %v521 = vsel %vm470, %v519, 0.0
      %v522 = vadd.f32 %v510, %v521
      %523 = vrot.lane.b32.xlu0 %v484, 127
      %v524 = vpop.permute.xlu0 %523
      %v526 = vadd.f32 %v522, %v524
      %s527 = smul.u32 %s24, 28
      %s528 = scvt.s32.f32 %s527
      %v529 = vstv %s528
      %v530 = vadd.f32 %v529, %v399
      %v531 = vadd.f32 %v530, 1.0
      %v532 = vmul.f32 %v531, 8.0
      %v533 = vrcp.pop %v532
      %v534 = vmul.f32 %v486, %v533
      %v535 = vmul.f32 %v526, %v533
      %v536 = vmul.f32 %v534, %v534
      %v537 = vsub.f32 %v535, %v536
      %v538 = vmax.f32 %v537, 0.0
      %540 = vset.pattern.permute.xlu0 0
      %541 = vperm.xlu0 %540, %v534
      %v542 = vpop.permute.xlu0 %541
      %v544 = vsub.f32 %v428, %v542
      %v545 = vrsqrt.pop %v538
      %v546 = vmul.f32 %v538, %v545
      %vm547 = vcmp.eq.f32.partialorder %v538, inf
      %v548 = vsel %vm547, %v538, %v546
      %vm549 = vcmp.eq.f32.partialorder %v538, 0.0
      %v550 = vand.u32 %v538, 2147483648
      %v551 = vsel %vm549, %v550, %v548
      %v552 = vadd.f32 %v551, 1e-12
      %554 = vset.pattern.permute.xlu0 0
      %555 = vperm.xlu0 %554, %v552
      %v556 = vpop.permute.xlu0 %555
      %v558 = vrcp.pop %v556
      %v559 = vmul.f32 %v544, %v558
      %v561 = vlaneseq
      %v562 = vshrl.u32 %v561, 7
      %v563 = vsub.s32 0, %v562
      %v564 = vrot.slane %v393, %v563
      %v566 = vmul.f32 %v559, %v564
      %v568 = vlaneseq
      %v569 = vshrl.u32 %v568, 7
      %v570 = vsub.s32 0, %v569
      %v571 = vrot.slane %v394, %v570
      %v573 = vadd.f32 %v566, %v571
      %v574 = vpack.c.bf16 %v573, %v573
      %v576 = vlaneseq
      %v577 = vshrl.u32 %v576, 7
      %v578 = vsub.s32 0, %v577
      %v579 = vrot.slane %v396, %v578
      %vm581 = vcmask 64512
      %v583 = vsel %vm581, %v574, 0
      %vm585 = vcmask 1043456
      %v587 = vsel %vm585, %v395, 0
      %589 = vmatprep.subr.bf16.mxu0 0
      %590 = vmatpush1.bf16.msra.mxu0 0
      %591 = vmatprep.subr.bf16.mxu0 0
      %592 = vmatpush1.bf16.msra.mxu0 0
      %593 = vmatprep.subr.bf16.mxu0 0
      %594 = vmatpush1.bf16.msra.mxu0 0
      %595 = vmatprep.subr.bf16.mxu0 0
      %596 = vmatpush1.bf16.msra.mxu0 0
      %597 = vmatprep.subr.bf16.mxu0 0
      %598 = vmatpush1.bf16.msra.mxu0 0
      %599 = vmatprep.subr.bf16.mxu0 0
      %600 = vmatpush1.bf16.msra.mxu0 0
      %601 = vmatprep.subr.bf16.mxu0 0
      %602 = vmatpush1.bf16.msra.mxu0 0
      %603 = vmatprep.subr.bf16.mxu0 0
      %604 = vmatpush1.bf16.msra.mxu0 %v587
      %605 = vmatprep.subr.bf16.mxu0 0
      %606 = vmatpush2.bf16.msra.mxu0 0
      %607 = vmatprep.subr.bf16.mxu0 0
      %608 = vmatpush2.bf16.msra.mxu0 0
      %609 = vmatprep.subr.bf16.mxu0 0
      %610 = vmatpush2.bf16.msra.mxu0 0
      %611 = vmatprep.subr.bf16.mxu0 0
      %612 = vmatpush2.bf16.msra.mxu0 0
      %613 = vmatprep.subr.bf16.mxu0 0
      %614 = vmatpush2.bf16.msra.mxu0 0
      %615 = vmatprep.subr.bf16.mxu0 0
      %616 = vmatpush2.bf16.msra.mxu0 0
      %617 = vmatprep.subr.bf16.mxu0 0
      %618 = vmatpush2.bf16.msra.mxu0 0
      %619 = vmatprep.subr.bf16.mxu0 0
      %620 = vmatpush2.bf16.msra.mxu0 0
      %621 = vmatprep.mubr.bf16.mxu0 0
      %622 = vmatmul.mubr.bf16.gmra.mxu0 %v583
      %v623 = vpop.f32.mrf.mxu0
      %v624 = vadd.f32 %v579, %v623
      %v625 = vpop.f32.mrf.mxu0
      %v626 = vpop.f32.mrf.mxu0
      %v627 = vpop.f32.mrf.mxu0
      %628 = vdwg.mxu0
      %vm629 = vcmask 260096
      %630 = vst.msk [vmem:[%s379] sm:$0x7f] %vm629, %v624
      %s631 = scalar_lea.vmem %s359, 8
      %v632 = vld [vmem:[%s631] sm:$0xff]
      %s633 = scalar_lea.vmem %s369, 8
      %v634 = vld [vmem:[%s633] sm:$0x7f]
      %v635 = vmul.f32 %v632, %v405
      %v636 = vadd.f32 %v411, %v635
      %v637 = vmul.f32 %v634, %v417
      %v638 = vadd.f32 %v636, %v637
      %v639 = vmul.f32 %v632, %v423
      %v641 = vrot.slane %v639, 1
      %v643 = vadd.f32 %v638, %v641
      %v644 = vsel %vm429, %v643, 0.0
      %645 = vadd.xlane.f32.xlu0 %v644
      %v646 = vpop.xlane.xlu0 %645
      %v647 = vmul.f32 %v643, %v643
      %v648 = vsel %vm429, %v647, 0.0
      %649 = vadd.xlane.f32.xlu0 %v648
      %v650 = vpop.xlane.xlu0 %649
      %v651 = vrot.slane %v646, 1
      %v652 = vsel %vm437, %v651, %v646
      %v653 = vrot.slane %v652, 1
      %v654 = vsel %vm437, %v653, %v646
      %v657 = vrot.slane %v654, 6
      %v658 = vrot.slane %v653, 6
      %v659 = vsel %vm445, %v657, %v658
      %v661 = vsel %vm442, %v659, 0.0
      %v662 = vadd.f32 %v646, %v661
      %v663 = vrot.slane %v662, 1
      %v664 = vsel %vm437, %v663, %v662
      %v665 = vrot.slane %v664, 1
      %v666 = vsel %vm437, %v665, %v662
      %v669 = vrot.slane %v666, 5
      %v670 = vrot.slane %v665, 5
      %v671 = vsel %vm459, %v669, %v670
      %v673 = vsel %vm456, %v671, 0.0
      %v674 = vadd.f32 %v662, %v673
      %v675 = vrot.slane %v674, 1
      %v676 = vsel %vm437, %v675, %v674
      %v677 = vrot.slane %v676, 1
      %v678 = vsel %vm437, %v677, %v674
      %v681 = vrot.slane %v678, 3
      %v682 = vrot.slane %v677, 3
      %v683 = vsel %vm473, %v681, %v682
      %v685 = vsel %vm470, %v683, 0.0
      %v686 = vadd.f32 %v674, %v685
      %v687 = vlaneseq
      %v688 = vshrl.u32 %v687, 7
      %v689 = vsub.s32 6, %v688
      %v690 = vrot.slane %v486, %v689
      %v691 = vadd.f32 %v686, %v690
      %v692 = vrot.slane %v650, 1
      %v693 = vsel %vm437, %v692, %v650
      %v694 = vrot.slane %v693, 1
      %v695 = vsel %vm437, %v694, %v650
      %v698 = vrot.slane %v695, 6
      %v699 = vrot.slane %v694, 6
      %v700 = vsel %vm445, %v698, %v699
      %v702 = vsel %vm442, %v700, 0.0
      %v703 = vadd.f32 %v650, %v702
      %v704 = vrot.slane %v703, 1
      %v705 = vsel %vm437, %v704, %v703
      %v706 = vrot.slane %v705, 1
      %v707 = vsel %vm437, %v706, %v703
      %v710 = vrot.slane %v707, 5
      %v711 = vrot.slane %v706, 5
      %v712 = vsel %vm459, %v710, %v711
      %v714 = vsel %vm456, %v712, 0.0
      %v715 = vadd.f32 %v703, %v714
      %v716 = vrot.slane %v715, 1
      %v717 = vsel %vm437, %v716, %v715
      %v718 = vrot.slane %v717, 1
      %v719 = vsel %vm437, %v718, %v715
      %v722 = vrot.slane %v719, 3
      %v723 = vrot.slane %v718, 3
      %v724 = vsel %vm473, %v722, %v723
      %v726 = vsel %vm470, %v724, 0.0
      %v727 = vadd.f32 %v715, %v726
      %v728 = vlaneseq
      %v729 = vshrl.u32 %v728, 7
      %v730 = vsub.s32 6, %v729
      %v731 = vrot.slane %v526, %v730
      %v732 = vadd.f32 %v727, %v731
      %s733 = smul.u32 %s24, 4
      %s734 = sadd.s32 %s733, 1
      %s735 = smul.u32 %s734, 7
      %s736 = scvt.s32.f32 %s735
      %v737 = vstv %s736
      %v738 = vadd.f32 %v737, %v399
      %v739 = vadd.f32 %v738, 1.0
      %v740 = vmul.f32 %v739, 8.0
      %v741 = vrcp.pop %v740
      %v742 = vmul.f32 %v691, %v741
      %v743 = vmul.f32 %v732, %v741
      %v744 = vmul.f32 %v742, %v742
      %v745 = vsub.f32 %v743, %v744
      %v746 = vmax.f32 %v745, 0.0
      %748 = vset.pattern.permute.xlu0 0
      %749 = vperm.xlu0 %748, %v742
      %v750 = vpop.permute.xlu0 %749
      %v752 = vsub.f32 %v643, %v750
      %v753 = vrsqrt.pop %v746
      %v754 = vmul.f32 %v746, %v753
      %vm755 = vcmp.eq.f32.partialorder %v746, inf
      %v756 = vsel %vm755, %v746, %v754
      %vm757 = vcmp.eq.f32.partialorder %v746, 0.0
      %v758 = vand.u32 %v746, 2147483648
      %v759 = vsel %vm757, %v758, %v756
      %v760 = vadd.f32 %v759, 1e-12
      %762 = vset.pattern.permute.xlu0 0
      %763 = vperm.xlu0 %762, %v760
      %v764 = vpop.permute.xlu0 %763
      %v766 = vrcp.pop %v764
      %v767 = vmul.f32 %v752, %v766
      %v768 = vmul.f32 %v767, %v564
      %v769 = vadd.f32 %v768, %v571
      %v770 = vpack.c.bf16 %v769, %v769
      %v772 = vsel %vm581, %v770, 0
      %774 = vmatprep.subr.bf16.mxu0 0
      %775 = vmatpush1.bf16.msra.mxu0 0
      %776 = vmatprep.subr.bf16.mxu0 0
      %777 = vmatpush1.bf16.msra.mxu0 0
      %778 = vmatprep.subr.bf16.mxu0 0
      %779 = vmatpush1.bf16.msra.mxu0 0
      %780 = vmatprep.subr.bf16.mxu0 0
      %781 = vmatpush1.bf16.msra.mxu0 0
      %782 = vmatprep.subr.bf16.mxu0 0
      %783 = vmatpush1.bf16.msra.mxu0 0
      %784 = vmatprep.subr.bf16.mxu0 0
      %785 = vmatpush1.bf16.msra.mxu0 0
      %786 = vmatprep.subr.bf16.mxu0 0
      %787 = vmatpush1.bf16.msra.mxu0 0
      %788 = vmatprep.subr.bf16.mxu0 0
      %789 = vmatpush1.bf16.msra.mxu0 %v587
      %790 = vmatprep.subr.bf16.mxu0 0
      %791 = vmatpush2.bf16.msra.mxu0 0
      %792 = vmatprep.subr.bf16.mxu0 0
      %793 = vmatpush2.bf16.msra.mxu0 0
      %794 = vmatprep.subr.bf16.mxu0 0
      %795 = vmatpush2.bf16.msra.mxu0 0
      %796 = vmatprep.subr.bf16.mxu0 0
      %797 = vmatpush2.bf16.msra.mxu0 0
      %798 = vmatprep.subr.bf16.mxu0 0
      %799 = vmatpush2.bf16.msra.mxu0 0
      %800 = vmatprep.subr.bf16.mxu0 0
      %801 = vmatpush2.bf16.msra.mxu0 0
      %802 = vmatprep.subr.bf16.mxu0 0
      %803 = vmatpush2.bf16.msra.mxu0 0
      %804 = vmatprep.subr.bf16.mxu0 0
      %805 = vmatpush2.bf16.msra.mxu0 0
      %806 = vmatprep.mubr.bf16.mxu0 0
      %807 = vmatmul.mubr.bf16.gmra.mxu0 %v772
      %v808 = vpop.f32.mrf.mxu0
      %v809 = vadd.f32 %v579, %v808
      %v810 = vpop.f32.mrf.mxu0
      %v811 = vpop.f32.mrf.mxu0
      %v812 = vpop.f32.mrf.mxu0
      %813 = vdwg.mxu0
      %s814 = scalar_lea.vmem %s379, 8
      %815 = vst.msk [vmem:[%s814] sm:$0x7f] %vm629, %v809
      %s816 = scalar_lea.vmem %s359, 16
      %v817 = vld [vmem:[%s816] sm:$0xff]
      %s818 = scalar_lea.vmem %s369, 16
      %v819 = vld [vmem:[%s818] sm:$0x7f]
      %v820 = vmul.f32 %v817, %v405
      %v821 = vadd.f32 %v411, %v820
      %v822 = vmul.f32 %v819, %v417
      %v823 = vadd.f32 %v821, %v822
      %v824 = vmul.f32 %v817, %v423
      %v826 = vrot.slane %v824, 1
      %v828 = vadd.f32 %v823, %v826
      %v829 = vsel %vm429, %v828, 0.0
      %830 = vadd.xlane.f32.xlu0 %v829
      %v831 = vpop.xlane.xlu0 %830
      %v832 = vmul.f32 %v828, %v828
      %v833 = vsel %vm429, %v832, 0.0
      %834 = vadd.xlane.f32.xlu0 %v833
      %v835 = vpop.xlane.xlu0 %834
      %v836 = vrot.slane %v831, 1
      %v837 = vsel %vm437, %v836, %v831
      %v838 = vrot.slane %v837, 1
      %v839 = vsel %vm437, %v838, %v831
      %v842 = vrot.slane %v839, 6
      %v843 = vrot.slane %v838, 6
      %v844 = vsel %vm445, %v842, %v843
      %v846 = vsel %vm442, %v844, 0.0
      %v847 = vadd.f32 %v831, %v846
      %v848 = vrot.slane %v847, 1
      %v849 = vsel %vm437, %v848, %v847
      %v850 = vrot.slane %v849, 1
      %v851 = vsel %vm437, %v850, %v847
      %v854 = vrot.slane %v851, 5
      %v855 = vrot.slane %v850, 5
      %v856 = vsel %vm459, %v854, %v855
      %v858 = vsel %vm456, %v856, 0.0
      %v859 = vadd.f32 %v847, %v858
      %v860 = vrot.slane %v859, 1
      %v861 = vsel %vm437, %v860, %v859
      %v862 = vrot.slane %v861, 1
      %v863 = vsel %vm437, %v862, %v859
      %v866 = vrot.slane %v863, 3
      %v867 = vrot.slane %v862, 3
      %v868 = vsel %vm473, %v866, %v867
      %v870 = vsel %vm470, %v868, 0.0
      %v871 = vadd.f32 %v859, %v870
      %v872 = vlaneseq
      %v873 = vshrl.u32 %v872, 7
      %v874 = vsub.s32 6, %v873
      %v875 = vrot.slane %v691, %v874
      %v876 = vadd.f32 %v871, %v875
      %v877 = vrot.slane %v835, 1
      %v878 = vsel %vm437, %v877, %v835
      %v879 = vrot.slane %v878, 1
      %v880 = vsel %vm437, %v879, %v835
      %v883 = vrot.slane %v880, 6
      %v884 = vrot.slane %v879, 6
      %v885 = vsel %vm445, %v883, %v884
      %v887 = vsel %vm442, %v885, 0.0
      %v888 = vadd.f32 %v835, %v887
      %v889 = vrot.slane %v888, 1
      %v890 = vsel %vm437, %v889, %v888
      %v891 = vrot.slane %v890, 1
      %v892 = vsel %vm437, %v891, %v888
      %v895 = vrot.slane %v892, 5
      %v896 = vrot.slane %v891, 5
      %v897 = vsel %vm459, %v895, %v896
      %v899 = vsel %vm456, %v897, 0.0
      %v900 = vadd.f32 %v888, %v899
      %v901 = vrot.slane %v900, 1
      %v902 = vsel %vm437, %v901, %v900
      %v903 = vrot.slane %v902, 1
      %v904 = vsel %vm437, %v903, %v900
      %v907 = vrot.slane %v904, 3
      %v908 = vrot.slane %v903, 3
      %v909 = vsel %vm473, %v907, %v908
      %v911 = vsel %vm470, %v909, 0.0
      %v912 = vadd.f32 %v900, %v911
      %v913 = vlaneseq
      %v914 = vshrl.u32 %v913, 7
      %v915 = vsub.s32 6, %v914
      %v916 = vrot.slane %v732, %v915
      %v917 = vadd.f32 %v912, %v916
      %s918 = sadd.s32 %s733, 2
      %s919 = smul.u32 %s918, 7
      %s920 = scvt.s32.f32 %s919
      %v921 = vstv %s920
      %v922 = vadd.f32 %v921, %v399
      %v923 = vadd.f32 %v922, 1.0
      %v924 = vmul.f32 %v923, 8.0
      %v925 = vrcp.pop %v924
      %v926 = vmul.f32 %v876, %v925
      %v927 = vmul.f32 %v917, %v925
      %v928 = vmul.f32 %v926, %v926
      %v929 = vsub.f32 %v927, %v928
      %v930 = vmax.f32 %v929, 0.0
      %932 = vset.pattern.permute.xlu0 0
      %933 = vperm.xlu0 %932, %v926
      %v934 = vpop.permute.xlu0 %933
      %v936 = vsub.f32 %v828, %v934
      %v937 = vrsqrt.pop %v930
      %v938 = vmul.f32 %v930, %v937
      %vm939 = vcmp.eq.f32.partialorder %v930, inf
      %v940 = vsel %vm939, %v930, %v938
      %vm941 = vcmp.eq.f32.partialorder %v930, 0.0
      %v942 = vand.u32 %v930, 2147483648
      %v943 = vsel %vm941, %v942, %v940
      %v944 = vadd.f32 %v943, 1e-12
      %946 = vset.pattern.permute.xlu0 0
      %947 = vperm.xlu0 %946, %v944
      %v948 = vpop.permute.xlu0 %947
      %v950 = vrcp.pop %v948
      %v951 = vmul.f32 %v936, %v950
      %v952 = vmul.f32 %v951, %v564
      %v953 = vadd.f32 %v952, %v571
      %v954 = vpack.c.bf16 %v953, %v953
      %v956 = vsel %vm581, %v954, 0
      %958 = vmatprep.subr.bf16.mxu0 0
      %959 = vmatpush1.bf16.msra.mxu0 0
      %960 = vmatprep.subr.bf16.mxu0 0
      %961 = vmatpush1.bf16.msra.mxu0 0
      %962 = vmatprep.subr.bf16.mxu0 0
      %963 = vmatpush1.bf16.msra.mxu0 0
      %964 = vmatprep.subr.bf16.mxu0 0
      %965 = vmatpush1.bf16.msra.mxu0 0
      %966 = vmatprep.subr.bf16.mxu0 0
      %967 = vmatpush1.bf16.msra.mxu0 0
      %968 = vmatprep.subr.bf16.mxu0 0
      %969 = vmatpush1.bf16.msra.mxu0 0
      %970 = vmatprep.subr.bf16.mxu0 0
      %971 = vmatpush1.bf16.msra.mxu0 0
      %972 = vmatprep.subr.bf16.mxu0 0
      %973 = vmatpush1.bf16.msra.mxu0 %v587
      %974 = vmatprep.subr.bf16.mxu0 0
      %975 = vmatpush2.bf16.msra.mxu0 0
      %976 = vmatprep.subr.bf16.mxu0 0
      %977 = vmatpush2.bf16.msra.mxu0 0
      %978 = vmatprep.subr.bf16.mxu0 0
      %979 = vmatpush2.bf16.msra.mxu0 0
      %980 = vmatprep.subr.bf16.mxu0 0
      %981 = vmatpush2.bf16.msra.mxu0 0
      %982 = vmatprep.subr.bf16.mxu0 0
      %983 = vmatpush2.bf16.msra.mxu0 0
      %984 = vmatprep.subr.bf16.mxu0 0
      %985 = vmatpush2.bf16.msra.mxu0 0
      %986 = vmatprep.subr.bf16.mxu0 0
      %987 = vmatpush2.bf16.msra.mxu0 0
      %988 = vmatprep.subr.bf16.mxu0 0
      %989 = vmatpush2.bf16.msra.mxu0 0
      %990 = vmatprep.mubr.bf16.mxu0 0
      %991 = vmatmul.mubr.bf16.gmra.mxu0 %v956
      %v992 = vpop.f32.mrf.mxu0
      %v993 = vadd.f32 %v579, %v992
      %v994 = vpop.f32.mrf.mxu0
      %v995 = vpop.f32.mrf.mxu0
      %v996 = vpop.f32.mrf.mxu0
      %997 = vdwg.mxu0
      %s998 = scalar_lea.vmem %s379, 16
      %999 = vst.msk [vmem:[%s998] sm:$0x7f] %vm629, %v993
      %s1000 = scalar_lea.vmem %s359, 24
      %v1001 = vld [vmem:[%s1000] sm:$0xff]
      %s1002 = scalar_lea.vmem %s369, 24
      %v1003 = vld [vmem:[%s1002] sm:$0x7f]
      %v1004 = vmul.f32 %v1001, %v405
      %v1005 = vadd.f32 %v411, %v1004
      %v1006 = vmul.f32 %v1003, %v417
      %v1007 = vadd.f32 %v1005, %v1006
      %v1008 = vmul.f32 %v1001, %v423
      %v1010 = vrot.slane %v1008, 1
      %v1012 = vadd.f32 %v1007, %v1010
      %v1013 = vsel %vm429, %v1012, 0.0
      %1014 = vadd.xlane.f32.xlu0 %v1013
      %v1015 = vpop.xlane.xlu0 %1014
      %v1016 = vmul.f32 %v1012, %v1012
      %v1017 = vsel %vm429, %v1016, 0.0
      %1018 = vadd.xlane.f32.xlu0 %v1017
      %v1019 = vpop.xlane.xlu0 %1018
      %v1020 = vrot.slane %v1015, 1
      %v1021 = vsel %vm437, %v1020, %v1015
      %v1022 = vrot.slane %v1021, 1
      %v1023 = vsel %vm437, %v1022, %v1015
      %v1026 = vrot.slane %v1023, 6
      %v1027 = vrot.slane %v1022, 6
      %v1028 = vsel %vm445, %v1026, %v1027
      %v1030 = vsel %vm442, %v1028, 0.0
      %v1031 = vadd.f32 %v1015, %v1030
      %v1032 = vrot.slane %v1031, 1
      %v1033 = vsel %vm437, %v1032, %v1031
      %v1034 = vrot.slane %v1033, 1
      %v1035 = vsel %vm437, %v1034, %v1031
      %v1038 = vrot.slane %v1035, 5
      %v1039 = vrot.slane %v1034, 5
      %v1040 = vsel %vm459, %v1038, %v1039
      %v1042 = vsel %vm456, %v1040, 0.0
      %v1043 = vadd.f32 %v1031, %v1042
      %v1044 = vrot.slane %v1043, 1
      %v1045 = vsel %vm437, %v1044, %v1043
      %v1046 = vrot.slane %v1045, 1
      %v1047 = vsel %vm437, %v1046, %v1043
      %v1050 = vrot.slane %v1047, 3
      %v1051 = vrot.slane %v1046, 3
      %v1052 = vsel %vm473, %v1050, %v1051
      %v1054 = vsel %vm470, %v1052, 0.0
      %v1055 = vadd.f32 %v1043, %v1054
      %v1056 = vlaneseq
      %v1057 = vshrl.u32 %v1056, 7
      %v1058 = vsub.s32 6, %v1057
      %v1059 = vrot.slane %v876, %v1058
      %v1060 = vadd.f32 %v1055, %v1059
      %v1061 = vrot.slane %v1019, 1
      %v1062 = vsel %vm437, %v1061, %v1019
      %v1063 = vrot.slane %v1062, 1
      %v1064 = vsel %vm437, %v1063, %v1019
      %v1067 = vrot.slane %v1064, 6
      %v1068 = vrot.slane %v1063, 6
      %v1069 = vsel %vm445, %v1067, %v1068
      %v1071 = vsel %vm442, %v1069, 0.0
      %v1072 = vadd.f32 %v1019, %v1071
      %v1073 = vrot.slane %v1072, 1
      %v1074 = vsel %vm437, %v1073, %v1072
      %v1075 = vrot.slane %v1074, 1
      %v1076 = vsel %vm437, %v1075, %v1072
      %v1079 = vrot.slane %v1076, 5
      %v1080 = vrot.slane %v1075, 5
      %v1081 = vsel %vm459, %v1079, %v1080
      %v1083 = vsel %vm456, %v1081, 0.0
      %v1084 = vadd.f32 %v1072, %v1083
      %v1085 = vrot.slane %v1084, 1
      %v1086 = vsel %vm437, %v1085, %v1084
      %v1087 = vrot.slane %v1086, 1
      %v1088 = vsel %vm437, %v1087, %v1084
      %v1091 = vrot.slane %v1088, 3
      %v1092 = vrot.slane %v1087, 3
      %v1093 = vsel %vm473, %v1091, %v1092
      %v1095 = vsel %vm470, %v1093, 0.0
      %v1096 = vadd.f32 %v1084, %v1095
      %v1097 = vlaneseq
      %v1098 = vshrl.u32 %v1097, 7
      %v1099 = vsub.s32 6, %v1098
      %v1100 = vrot.slane %v917, %v1099
      %v1101 = vadd.f32 %v1096, %v1100
      %s1102 = sadd.s32 %s733, 3
      %s1103 = smul.u32 %s1102, 7
      %s1104 = scvt.s32.f32 %s1103
      %v1105 = vstv %s1104
      %v1106 = vadd.f32 %v1105, %v399
      %v1107 = vadd.f32 %v1106, 1.0
      %v1108 = vmul.f32 %v1107, 8.0
      %v1109 = vrcp.pop %v1108
      %v1110 = vmul.f32 %v1060, %v1109
      %v1111 = vmul.f32 %v1101, %v1109
      %v1112 = vmul.f32 %v1110, %v1110
      %v1113 = vsub.f32 %v1111, %v1112
      %v1114 = vmax.f32 %v1113, 0.0
      %1116 = vset.pattern.permute.xlu0 0
      %1117 = vperm.xlu0 %1116, %v1110
      %v1118 = vpop.permute.xlu0 %1117
      %v1120 = vsub.f32 %v1012, %v1118
      %v1121 = vrsqrt.pop %v1114
      %v1122 = vmul.f32 %v1114, %v1121
      %vm1123 = vcmp.eq.f32.partialorder %v1114, inf
      %v1124 = vsel %vm1123, %v1114, %v1122
      %vm1125 = vcmp.eq.f32.partialorder %v1114, 0.0
      %v1126 = vand.u32 %v1114, 2147483648
      %v1127 = vsel %vm1125, %v1126, %v1124
      %v1128 = vadd.f32 %v1127, 1e-12
      %1130 = vset.pattern.permute.xlu0 0
      %1131 = vperm.xlu0 %1130, %v1128
      %v1132 = vpop.permute.xlu0 %1131
      %v1134 = vrcp.pop %v1132
      %v1135 = vmul.f32 %v1120, %v1134
      %v1136 = vmul.f32 %v1135, %v564
      %v1137 = vadd.f32 %v1136, %v571
      %v1138 = vpack.c.bf16 %v1137, %v1137
      %v1140 = vsel %vm581, %v1138, 0
      %1142 = vmatprep.subr.bf16.mxu0 0
      %1143 = vmatpush1.bf16.msra.mxu0 0
      %1144 = vmatprep.subr.bf16.mxu0 0
      %1145 = vmatpush1.bf16.msra.mxu0 0
      %1146 = vmatprep.subr.bf16.mxu0 0
      %1147 = vmatpush1.bf16.msra.mxu0 0
      %1148 = vmatprep.subr.bf16.mxu0 0
      %1149 = vmatpush1.bf16.msra.mxu0 0
      %1150 = vmatprep.subr.bf16.mxu0 0
      %1151 = vmatpush1.bf16.msra.mxu0 0
      %1152 = vmatprep.subr.bf16.mxu0 0
      %1153 = vmatpush1.bf16.msra.mxu0 0
      %1154 = vmatprep.subr.bf16.mxu0 0
      %1155 = vmatpush1.bf16.msra.mxu0 0
      %1156 = vmatprep.subr.bf16.mxu0 0
      %1157 = vmatpush1.bf16.msra.mxu0 %v587
      %1158 = vmatprep.subr.bf16.mxu0 0
      %1159 = vmatpush2.bf16.msra.mxu0 0
      %1160 = vmatprep.subr.bf16.mxu0 0
      %1161 = vmatpush2.bf16.msra.mxu0 0
      %1162 = vmatprep.subr.bf16.mxu0 0
      %1163 = vmatpush2.bf16.msra.mxu0 0
      %1164 = vmatprep.subr.bf16.mxu0 0
      %1165 = vmatpush2.bf16.msra.mxu0 0
      %1166 = vmatprep.subr.bf16.mxu0 0
      %1167 = vmatpush2.bf16.msra.mxu0 0
      %1168 = vmatprep.subr.bf16.mxu0 0
      %1169 = vmatpush2.bf16.msra.mxu0 0
      %1170 = vmatprep.subr.bf16.mxu0 0
      %1171 = vmatpush2.bf16.msra.mxu0 0
      %1172 = vmatprep.subr.bf16.mxu0 0
      %1173 = vmatpush2.bf16.msra.mxu0 0
      %1174 = vmatprep.mubr.bf16.mxu0 0
      %1175 = vmatmul.mubr.bf16.gmra.mxu0 %v1140
      %v1176 = vpop.f32.mrf.mxu0
      %v1177 = vadd.f32 %v579, %v1176
      %v1178 = vpop.f32.mrf.mxu0
      %v1179 = vpop.f32.mrf.mxu0
      %v1180 = vpop.f32.mrf.mxu0
      %1181 = vdwg.mxu0
      %s1182 = scalar_lea.vmem %s379, 24
      %1183 = vst.msk [vmem:[%s1182] sm:$0x7f] %vm629, %v1177
      %vm1184 = vcmask 6150
      %1185 = vst.msk [vmem:[#allocation2 - $0x6] sm:$0x40] %vm1184, %v1060
      %1187 = vrot.lane.b32.xlu0 %v1101, 1
      %v1188 = vpop.permute.xlu0 %1187
      %vm1190 = vcmask 14350
      %1191 = vst.msk [vmem:[#allocation2 - $0x6] sm:$0x40] %vm1190, %v1188
      %s1192 = smul.u32 4, %s24
      %p1193 = scmp.lt.s32.totalorder %s23, 1
      %s1194 = scalar_select %p1193, %s23, 1
      %p1195 = scmp.lt.s32.totalorder %s1192, 7
      %s1196 = scalar_select %p1195, %s1192, 7
      %s1197 = smul.addr %s1194, 8
      %s1198 = sadd.s32 %s1196, %s1197
      %s1199 = smul.addr %s1198, 8
      %s1200 = scalar_lea.vmem %s8, %s1199
      // Predicated region
      $region57: #{depthwise_separable_conv2d.1} parent=51 // pred_check
        %p1201 = pneg %p233
      $region58: #{depthwise_separable_conv2d.1} parent=51 // pred_check_branch
        %1203 = sbr.rel (%p1201) target = $region60
      $region59: #{depthwise_separable_conv2d.1} parent=51 // pred_region
        %s1204 = smul.u32 4, %s24
      $region60: #{depthwise_separable_conv2d.1} parent=51 // pred_fallthru
        _
    $region52: #{depthwise_separable_conv2d.1} parent=5 // pred_fallthru
      _
    %p1205 = scmp.le.s32.totalorder 2, %s14
    // Predicated region
    $region61: #{depthwise_separable_conv2d.1} parent=5 // pred_check
      %p1206 = pneg %p1205
    $region62: #{depthwise_separable_conv2d.1} parent=5 // pred_check_branch
      %1208 = sbr.rel (%p1206) target = $region64
    $region63: #{depthwise_separable_conv2d.1} parent=5 // pred_region
      %s1209 = ssub.s32 %s14, 2
      // Predicated region
      $region65: #{depthwise_separable_conv2d.1} parent=63 // pred_check
        %p1210 = pneg %p239
      $region66: #{depthwise_separable_conv2d.1} parent=63 // pred_check_branch
        %1212 = sbr.rel (%p1210) target = $region68
      $region67: #{depthwise_separable_conv2d.1} parent=63 // pred_region
        %s1213 = smul.u32 4, %s26
        %p1214 = scmp.lt.s32.totalorder %s25, 1
        %s1215 = scalar_select %p1214, %s25, 1
        %p1216 = scmp.lt.s32.totalorder %s1213, 7
        %s1217 = scalar_select %p1216, %s1213, 7
        %s1218 = smul.addr %s1215, 8
        %s1219 = sadd.s32 %s1217, %s1218
        %s1220 = smul.addr %s1219, 8
        %s1221 = scalar_lea.vmem %s8, %s1220
      $region68: #{depthwise_separable_conv2d.1} parent=63 // pred_fallthru
        _
    $region64: #{depthwise_separable_conv2d.1} parent=5 // pred_fallthru
      _
  $region6: #{depthwise_separable_conv2d.1} parent=0 // loop_footer
    %s18 = sadd.s32 1, %s14
  $region7: #{depthwise_separable_conv2d.1} parent=0 // loop_footer_branch
    %13 = sbr.rel target = $region3
  $region8: #{depthwise_separable_conv2d.1} parent=0 // loop_exit
    _

</llo_original>
